<compile_context>
chip_gen: v5e
topology: v5e:2x2
jax: 0.10.0
libtpu: 0.0.40
codegen_flags: <defaults>
</compile_context>

<pallas_src>
import jax
import jax.numpy as jnp
import numpy as np
from jax.experimental import pallas as pl
from jax.experimental.pallas import tpu as pltpu


# ---------------------------------------------------------------------------
# Fused kernel factory (transposed layout: activations are [D, TB])
# ---------------------------------------------------------------------------
def _make_fused_kernel(n_layers, enc_use_ln, dec_use_ln, w_specs, v_specs):
    """w_specs: tuple of (row_off, dout, din) into the weight blob, in the exact
    order the kernel consumes weights.  v_specs: tuple of (row_off, D) into the
    bias/LN vector blob."""

    def kernel(x_ref, tc_ref, wb_ref, vb_ref, o_ref):
        w_it = iter(w_specs)
        v_it = iter(v_specs)

        def W():
            off, dout, din = next(w_it)
            return wb_ref[off:off + dout, 0:din]          # static slice: free

        def V():
            off, d = next(v_it)
            return vb_ref[off:off + d, :]                 # (d, 1) column

        def mm(w, a):
            # (dout, din) @ (din, TB) -> (dout, TB), f32 accumulation on MXU
            return jnp.dot(w, a, preferred_element_type=jnp.float32)

        def layernorm(y, gamma, beta):
            # normalize over features = sublane axis (axis 0)
            mu = jnp.mean(y, axis=0, keepdims=True)
            d = y - mu
            var = jnp.mean(d * d, axis=0, keepdims=True)
            return d * jax.lax.rsqrt(var + 1e-5) * gamma + beta

        tc = tc_ref[...]                                  # (8, TB): row0 = t, rows1-2 = c
        tval = (tc[0:1, :] + 1.0) / 1000.0                # (1, TB)

        # ---- time embedding: Linear(1,T)+ReLU -> Linear(T,T)
        # K=1 matmul done as a VPU broadcast multiply (outer product).
        tw1, tw2 = W(), W()
        tb1, tb2 = V(), V()
        ht = jnp.maximum(tw1 * tval + tb1, 0.0)           # (T,1)*(1,TB) -> (T,TB)
        et = mm(tw2, ht) + tb2

        # ---- condition embedding: Linear(2,T)+ReLU -> Linear(T,T)
        # K=2 matmul done as two broadcast multiply-adds.
        cw1, cw2 = W(), W()
        cb1, cb2 = V(), V()
        hc = cw1[:, 0:1] * tc[1:2, :] + cw1[:, 1:2] * tc[2:3, :] + cb1
        hc = jnp.maximum(hc, 0.0)
        ec = mm(cw2, hc) + cb2

        # ---- encoder resblocks
        x = x_ref[...]                                    # (d_in0, TB)
        skips = []
        for li in range(n_layers):
            w1, w2, w3, ws = W(), W(), W(), W()
            b1, b2, b3, bs, gamma, beta = V(), V(), V(), V(), V(), V()
            h = jnp.maximum(mm(w1, x) + b1, 0.0)
            h = jnp.maximum(mm(w2, h) + b2, 0.0)
            h = mm(w3, h) + b3
            y = h + mm(ws, x) + bs
            if enc_use_ln[li]:
                y = layernorm(y, gamma, beta)
            x = y
            skips.append(x)

        # ---- decoder resblocks: concat([x, et, ec, skip]) along the sublane
        #      axis (8-aligned offsets), then ONE full-K matmul for layer-1 and
        #      one for the shortcut.
        for li in range(n_layers):
            w1, w2, w3, ws = W(), W(), W(), W()
            b1, b2, b3, bs, gamma, beta = V(), V(), V(), V(), V(), V()
            skip = skips.pop(-1)
            cat = jnp.concatenate([x, et, ec, skip], axis=0)   # (din, TB)
            h = jnp.maximum(mm(w1, cat) + b1, 0.0)
            h = jnp.maximum(mm(w2, h) + b2, 0.0)
            h = mm(w3, h) + b3
            y = h + mm(ws, cat) + bs
            if dec_use_ln[li]:
                y = layernorm(y, gamma, beta)
            x = y

        o_ref[...] = x                                    # (d_out, TB): dense store

    return kernel


# ---------------------------------------------------------------------------
# Forward wrapper: packs params into two blobs + single pallas_call
# ---------------------------------------------------------------------------
def make_net_forward(embed_dim_list, time_dim, tile_b=256):
    L = len(embed_dim_list) - 1
    rev = list(reversed(embed_dim_list))
    T = time_dim
    enc_use_ln = tuple(True for _ in range(L))
    dec_use_ln = tuple(i < L - 1 for i in range(L))
    d_in0 = embed_dim_list[0]
    d_out = rev[-1]                                       # == embed_dim_list[0]

    # ---- static packing plan (shapes after transpose to [out, in]) ----------
    w_shapes = [(T, 1), (T, T), (T, 2), (T, T)]           # tw1, tw2, cw1, cw2
    v_dims = [T, T, T, T]                                 # tb1, tb2, cb1, cb2
    for i in range(L):
        d0, d1 = embed_dim_list[i], embed_dim_list[i + 1]
        w_shapes += [(d0, d0), (d1, d0), (d1, d1), (d1, d0)]
        v_dims += [d0, d1, d1, d1, d1, d1]
    for i in range(L):
        din = rev[i] * 2 + 2 * T
        d1 = rev[i + 1]
        w_shapes += [(din, din), (d1, din), (d1, d1), (d1, din)]
        v_dims += [din, d1, d1, d1, d1, d1]

    WC = max(128, -(-max(s[1] for s in w_shapes) // 128) * 128)   # blob lane width
    w_offsets, off = [], 0
    for dout, _ in w_shapes:
        w_offsets.append(off)
        off += dout
    RW = off
    v_offsets, off = [], 0
    for d in v_dims:
        v_offsets.append(off)
        off += d
    RV = off

    w_specs = tuple((o, s[0], s[1]) for o, s in zip(w_offsets, w_shapes))
    v_specs = tuple(zip(v_offsets, v_dims))

    kernel = _make_fused_kernel(L, enc_use_ln, dec_use_ln, w_specs, v_specs)

    def pack(params):
        ws = [params["t_w1"], params["t_w2"], params["c_w1"], params["c_w2"]]
        vs = [params["t_b1"], params["t_b2"], params["c_b1"], params["c_b2"]]
        for p in params["encoder"] + params["decoder"]:
            ws += [p["w1"], p["w2"], p["w3"], p["ws"]]
            vs += [p["b1"], p["b2"], p["b3"], p["bs"], p["gamma"], p["beta"]]
        rows = []
        for w in ws:
            wt = jnp.asarray(w, jnp.float32).T            # (dout, din)
            din = wt.shape[1]
            if din < WC:
                wt = jnp.pad(wt, ((0, 0), (0, WC - din)))
            rows.append(wt)
        wblob = jnp.concatenate(rows, axis=0)             # (RW, WC)
        vblob = jnp.concatenate(
            [jnp.asarray(v, jnp.float32).reshape(-1, 1) for v in vs], axis=0)  # (RV, 1)
        return wblob, vblob

    def forward(params, x, t, c):
        B = x.shape[0]
        # Batch tile selection:
        #  * >=2 even tiles of tile_b  -> pipelined grid; "parallel" lets v7x
        #    shard the two TensorCores across it.
        #  * otherwise one tile (grid=(1,)): on single-TC v5e/v6e a single
        #    larger block beats per-step overhead, and this model's block
        #    (<1 MiB weights + (D<=128, B) activations) stays far below VMEM
        #    limits for any reasonable B.
        tb = tile_b if (B % tile_b == 0 and B >= 2 * tile_b) else B
        grid = (B // tb,)

        # Transposed [features, batch] inputs; t and c merged into one padded slab.
        xt = x.astype(jnp.float32).T                      # (d_in0, B)
        tc = jnp.concatenate(
            [t.reshape(1, -1).astype(jnp.float32),
             c.astype(jnp.float32).T,
             jnp.zeros((5, B), jnp.float32)], axis=0)     # (8, B)

        wblob, vblob = pack(params)

        out_t = pl.pallas_call(
            kernel,
            out_shape=jax.ShapeDtypeStruct((d_out, B), jnp.float32),
            grid=grid,
            in_specs=[
                pl.BlockSpec((d_in0, tb), lambda i: (0, i)),
                pl.BlockSpec((8, tb), lambda i: (0, i)),
                # constant index maps -> blobs stay resident in VMEM
                pl.BlockSpec((RW, WC), lambda i: (0, 0)),
                pl.BlockSpec((RV, 1), lambda i: (0, 0)),
            ],
            out_specs=pl.BlockSpec((d_out, tb), lambda i: (0, i)),
            compiler_params=pltpu.CompilerParams(
                dimension_semantics=("parallel",)),
        )(xt, tc, wblob, vblob)
        return out_t.T                                    # back to (B, d_out)

    return jax.jit(forward)


# ---------------------------------------------------------------------------
# Parameter construction (deterministic, PyTorch-Linear-style uniform init)
# ---------------------------------------------------------------------------
def _linear_params(key, d_in, d_out):
    kw, kb = jax.random.split(key)
    bound = 1.0 / np.sqrt(d_in)
    w = jax.random.uniform(kw, (d_in, d_out), jnp.float32, -bound, bound)
    b = jax.random.uniform(kb, (1, d_out), jnp.float32, -bound, bound)
    return w, b


def _resblock_params(key, d0, d1):
    ks = jax.random.split(key, 4)
    w1, b1 = _linear_params(ks[0], d0, d0)
    w2, b2 = _linear_params(ks[1], d0, d1)
    w3, b3 = _linear_params(ks[2], d1, d1)
    ws, bs = _linear_params(ks[3], d0, d1)
    return dict(w1=w1, b1=b1, w2=w2, b2=b2, w3=w3, b3=b3, ws=ws, bs=bs,
                gamma=jnp.ones((1, d1), jnp.float32),
                beta=jnp.zeros((1, d1), jnp.float32))


def init_net(key, embed_dim_list, time_dim):
    L = len(embed_dim_list) - 1
    keys = jax.random.split(key, 4 + 2 * L)
    ki = iter(keys)
    params = {}
    params["t_w1"], params["t_b1"] = _linear_params(next(ki), 1, time_dim)
    params["t_w2"], params["t_b2"] = _linear_params(next(ki), time_dim, time_dim)
    params["c_w1"], params["c_b1"] = _linear_params(next(ki), 2, time_dim)
    params["c_w2"], params["c_b2"] = _linear_params(next(ki), time_dim, time_dim)
    rev = list(reversed(embed_dim_list))
    params["encoder"] = [
        _resblock_params(next(ki), embed_dim_list[i], embed_dim_list[i + 1])
        for i in range(L)]
    params["decoder"] = [
        _resblock_params(next(ki), rev[i] * 2 + time_dim * 2, rev[i + 1])
        for i in range(L)]
    return params


# ---------------------------------------------------------------------------
# Pure-JAX reference (original feature-last concat formulation) for validation
# ---------------------------------------------------------------------------
def _rb_ref(x, p, use_ln):
    h = jnp.maximum(x @ p["w1"] + p["b1"], 0.0)
    h = jnp.maximum(h @ p["w2"] + p["b2"], 0.0)
    h = h @ p["w3"] + p["b3"]
    y = h + (x @ p["ws"] + p["bs"])
    if use_ln:
        mu = jnp.mean(y, axis=-1, keepdims=True)
        var = jnp.mean((y - mu) ** 2, axis=-1, keepdims=True)
        y = (y - mu) * jax.lax.rsqrt(var + 1e-5) * p["gamma"] + p["beta"]
    return y


def net_forward_ref(params, x, t, c, embed_dim_list):
    L = len(embed_dim_list) - 1
    t = (t.reshape(-1, 1).astype(jnp.float32) + 1.0) / 1000.0
    et = jnp.maximum(t @ params["t_w1"] + params["t_b1"], 0.0) @ params["t_w2"] + params["t_b2"]
    ec = jnp.maximum(c @ params["c_w1"] + params["c_b1"], 0.0) @ params["c_w2"] + params["c_b2"]
    contex = []
    for rb in params["encoder"]:
        x = _rb_ref(x, rb, True)
        contex.append(x)
    for i, rb in enumerate(params["decoder"]):
        x = jnp.concatenate([x, et, ec, contex.pop(-1)], axis=-1)
        x = _rb_ref(x, rb, i < L - 1)
    return x


if __name__ == "__main__":
    embed_dim_list = [8, 16, 32]
    time_dim = 32
    batch = 512          # two 256-lane batch tiles -> pipelining / v7x megacore split
    tile_b = 256

    key = jax.random.PRNGKey(0)
    k_params, k_x, k_t, k_c = jax.random.split(key, 4)

    params = init_net(k_params, embed_dim_list, time_dim)
    x = jax.random.normal(k_x, (batch, embed_dim_list[0]), jnp.float32)
    t = jax.random.randint(k_t, (batch,), 0, 1000).astype(jnp.float32)
    c = jax.random.normal(k_c, (batch, 2), jnp.float32)

    forward = make_net_forward(embed_dim_list, time_dim, tile_b=tile_b)
    out = jax.block_until_ready(forward(params, x, t, c))

    ref = jax.block_until_ready(net_forward_ref(params, x, t, c, embed_dim_list))
    assert out.shape == (batch, embed_dim_list[0])
    np.testing.assert_allclose(np.asarray(out), np.asarray(ref), rtol=1e-4, atol=1e-4)

    print("KERNEL_OK")
</pallas_src>

<mosaic_0001>
module attributes {stable_mosaic.version = 11 : i64} {
  func.func @kernel(%arg0: i32, %arg1: memref<8x256xf32, #tpu.memory_space<vmem>>, %arg2: memref<8x256xf32, #tpu.memory_space<vmem>>, %arg3: memref<592x128xf32, #tpu.memory_space<vmem>>, %arg4: memref<736x1xf32, #tpu.memory_space<vmem>>, %arg5: memref<8x256xf32, #tpu.memory_space<vmem>>) attributes {dimension_semantics = [#tpu.dimension_semantics<parallel>], iteration_bounds = array<i64: 2>, scalar_prefetch = 0 : i64, scratch_operands = 0 : i64, tpu.core_type = #tpu.core_type<tc>, window_params = [{transform_indices = @transform_0, window_bounds = array<i64: 8, 256>}, {transform_indices = @transform_1, window_bounds = array<i64: 8, 256>}, {pipeline_mode = #tpu.pipeline_mode<synchronous>, transform_indices = @transform_2, window_bounds = array<i64: 592, 128>}, {pipeline_mode = #tpu.pipeline_mode<synchronous>, transform_indices = @transform_3, window_bounds = array<i64: 736, 1>}, {transform_indices = @transform_4, window_bounds = array<i64: 8, 256>}]} {
    %c0 = arith.constant 0 : index
    %c0_0 = arith.constant 0 : index
    %0 = vector.load %arg2[%c0, %c0_0] : memref<8x256xf32, #tpu.memory_space<vmem>>, vector<8x256xf32>
    %1 = vector.extract_strided_slice %0 {offsets = [0, 0], sizes = [1, 256], strides = [1, 1]} : vector<8x256xf32> to vector<1x256xf32>
    %cst = arith.constant 1.000000e+00 : f32
    %2 = vector.broadcast %cst : f32 to vector<1x256xf32>
    %3 = arith.addf %1, %2 : vector<1x256xf32>
    %cst_1 = arith.constant 1.000000e+03 : f32
    %4 = vector.broadcast %cst_1 : f32 to vector<1x256xf32>
    %5 = arith.divf %3, %4 : vector<1x256xf32>
    %c0_2 = arith.constant 0 : index
    %c0_3 = arith.constant 0 : index
    %6 = vector.load %arg3[%c0_2, %c0_3] : memref<592x128xf32, #tpu.memory_space<vmem>>, vector<32x1xf32>
    %c32 = arith.constant 32 : index
    %c0_4 = arith.constant 0 : index
    %7 = vector.load %arg3[%c32, %c0_4] : memref<592x128xf32, #tpu.memory_space<vmem>>, vector<32x32xf32>
    %c0_5 = arith.constant 0 : index
    %c0_6 = arith.constant 0 : index
    %8 = vector.load %arg4[%c0_5, %c0_6] : memref<736x1xf32, #tpu.memory_space<vmem>>, vector<32x1xf32>
    %c32_7 = arith.constant 32 : index
    %c0_8 = arith.constant 0 : index
    %9 = vector.load %arg4[%c32_7, %c0_8] : memref<736x1xf32, #tpu.memory_space<vmem>>, vector<32x1xf32>
    %10 = vector.broadcast %6 : vector<32x1xf32> to vector<32x256xf32>
    %11 = vector.broadcast %5 : vector<1x256xf32> to vector<32x256xf32>
    %12 = arith.mulf %10, %11 : vector<32x256xf32>
    %13 = vector.broadcast %8 : vector<32x1xf32> to vector<32x256xf32>
    %14 = arith.addf %12, %13 : vector<32x256xf32>
    %cst_9 = arith.constant 0.000000e+00 : f32
    %15 = vector.broadcast %cst_9 : f32 to vector<32x256xf32>
    %16 = arith.maximumf %14, %15 : vector<32x256xf32>
    %cst_10 = arith.constant dense<0.000000e+00> : vector<32x256xf32>
    %17 = tpu.matmul %7, %16, %cst_10 {dimension_numbers = #tpu.dot_dimension_numbers<[1], [0], [0], [1], [0, 0, 1, 1], [], []>} : vector<32x32xf32>, vector<32x256xf32>, vector<32x256xf32> -> vector<32x256xf32>
    %18 = vector.broadcast %9 : vector<32x1xf32> to vector<32x256xf32>
    %19 = arith.addf %17, %18 : vector<32x256xf32>
    %c64 = arith.constant 64 : index
    %c0_11 = arith.constant 0 : index
    %20 = vector.load %arg3[%c64, %c0_11] : memref<592x128xf32, #tpu.memory_space<vmem>>, vector<32x2xf32>
    %c96 = arith.constant 96 : index
    %c0_12 = arith.constant 0 : index
    %21 = vector.load %arg3[%c96, %c0_12] : memref<592x128xf32, #tpu.memory_space<vmem>>, vector<32x32xf32>
    %c64_13 = arith.constant 64 : index
    %c0_14 = arith.constant 0 : index
    %22 = vector.load %arg4[%c64_13, %c0_14] : memref<736x1xf32, #tpu.memory_space<vmem>>, vector<32x1xf32>
    %c96_15 = arith.constant 96 : index
    %c0_16 = arith.constant 0 : index
    %23 = vector.load %arg4[%c96_15, %c0_16] : memref<736x1xf32, #tpu.memory_space<vmem>>, vector<32x1xf32>
    %24 = vector.extract_strided_slice %20 {offsets = [0, 0], sizes = [32, 1], strides = [1, 1]} : vector<32x2xf32> to vector<32x1xf32>
    %25 = vector.extract_strided_slice %0 {offsets = [1, 0], sizes = [1, 256], strides = [1, 1]} : vector<8x256xf32> to vector<1x256xf32>
    %26 = vector.broadcast %24 : vector<32x1xf32> to vector<32x256xf32>
    %27 = vector.broadcast %25 : vector<1x256xf32> to vector<32x256xf32>
    %28 = arith.mulf %26, %27 : vector<32x256xf32>
    %29 = vector.extract_strided_slice %20 {offsets = [0, 1], sizes = [32, 1], strides = [1, 1]} : vector<32x2xf32> to vector<32x1xf32>
    %30 = vector.extract_strided_slice %0 {offsets = [2, 0], sizes = [1, 256], strides = [1, 1]} : vector<8x256xf32> to vector<1x256xf32>
    %31 = vector.broadcast %29 : vector<32x1xf32> to vector<32x256xf32>
    %32 = vector.broadcast %30 : vector<1x256xf32> to vector<32x256xf32>
    %33 = arith.mulf %31, %32 : vector<32x256xf32>
    %34 = arith.addf %28, %33 : vector<32x256xf32>
    %35 = vector.broadcast %22 : vector<32x1xf32> to vector<32x256xf32>
    %36 = arith.addf %34, %35 : vector<32x256xf32>
    %cst_17 = arith.constant 0.000000e+00 : f32
    %37 = vector.broadcast %cst_17 : f32 to vector<32x256xf32>
    %38 = arith.maximumf %36, %37 : vector<32x256xf32>
    %cst_18 = arith.constant dense<0.000000e+00> : vector<32x256xf32>
    %39 = tpu.matmul %21, %38, %cst_18 {dimension_numbers = #tpu.dot_dimension_numbers<[1], [0], [0], [1], [0, 0, 1, 1], [], []>} : vector<32x32xf32>, vector<32x256xf32>, vector<32x256xf32> -> vector<32x256xf32>
    %40 = vector.broadcast %23 : vector<32x1xf32> to vector<32x256xf32>
    %41 = arith.addf %39, %40 : vector<32x256xf32>
    %c0_19 = arith.constant 0 : index
    %c0_20 = arith.constant 0 : index
    %42 = vector.load %arg1[%c0_19, %c0_20] : memref<8x256xf32, #tpu.memory_space<vmem>>, vector<8x256xf32>
    %c128 = arith.constant 128 : index
    %c0_21 = arith.constant 0 : index
    %43 = vector.load %arg3[%c128, %c0_21] : memref<592x128xf32, #tpu.memory_space<vmem>>, vector<8x8xf32>
    %c136 = arith.constant 136 : index
    %c0_22 = arith.constant 0 : index
    %44 = vector.load %arg3[%c136, %c0_22] : memref<592x128xf32, #tpu.memory_space<vmem>>, vector<16x8xf32>
    %c152 = arith.constant 152 : index
    %c0_23 = arith.constant 0 : index
    %45 = vector.load %arg3[%c152, %c0_23] : memref<592x128xf32, #tpu.memory_space<vmem>>, vector<16x16xf32>
    %c168 = arith.constant 168 : index
    %c0_24 = arith.constant 0 : index
    %46 = vector.load %arg3[%c168, %c0_24] : memref<592x128xf32, #tpu.memory_space<vmem>>, vector<16x8xf32>
    %c128_25 = arith.constant 128 : index
    %c0_26 = arith.constant 0 : index
    %47 = vector.load %arg4[%c128_25, %c0_26] : memref<736x1xf32, #tpu.memory_space<vmem>>, vector<8x1xf32>
    %c136_27 = arith.constant 136 : index
    %c0_28 = arith.constant 0 : index
    %48 = vector.load %arg4[%c136_27, %c0_28] : memref<736x1xf32, #tpu.memory_space<vmem>>, vector<16x1xf32>
    %c152_29 = arith.constant 152 : index
    %c0_30 = arith.constant 0 : index
    %49 = vector.load %arg4[%c152_29, %c0_30] : memref<736x1xf32, #tpu.memory_space<vmem>>, vector<16x1xf32>
    %c168_31 = arith.constant 168 : index
    %c0_32 = arith.constant 0 : index
    %50 = vector.load %arg4[%c168_31, %c0_32] : memref<736x1xf32, #tpu.memory_space<vmem>>, vector<16x1xf32>
    %c184 = arith.constant 184 : index
    %c0_33 = arith.constant 0 : index
    %51 = vector.load %arg4[%c184, %c0_33] : memref<736x1xf32, #tpu.memory_space<vmem>>, vector<16x1xf32>
    %c200 = arith.constant 200 : index
    %c0_34 = arith.constant 0 : index
    %52 = vector.load %arg4[%c200, %c0_34] : memref<736x1xf32, #tpu.memory_space<vmem>>, vector<16x1xf32>
    %cst_35 = arith.constant dense<0.000000e+00> : vector<8x256xf32>
    %53 = tpu.matmul %43, %42, %cst_35 {dimension_numbers = #tpu.dot_dimension_numbers<[1], [0], [0], [1], [0, 0, 1, 1], [], []>} : vector<8x8xf32>, vector<8x256xf32>, vector<8x256xf32> -> vector<8x256xf32>
    %54 = vector.broadcast %47 : vector<8x1xf32> to vector<8x256xf32>
    %55 = arith.addf %53, %54 : vector<8x256xf32>
    %cst_36 = arith.constant 0.000000e+00 : f32
    %56 = vector.broadcast %cst_36 : f32 to vector<8x256xf32>
    %57 = arith.maximumf %55, %56 : vector<8x256xf32>
    %cst_37 = arith.constant dense<0.000000e+00> : vector<16x256xf32>
    %58 = tpu.matmul %44, %57, %cst_37 {dimension_numbers = #tpu.dot_dimension_numbers<[1], [0], [0], [1], [0, 0, 1, 1], [], []>} : vector<16x8xf32>, vector<8x256xf32>, vector<16x256xf32> -> vector<16x256xf32>
    %59 = vector.broadcast %48 : vector<16x1xf32> to vector<16x256xf32>
    %60 = arith.addf %58, %59 : vector<16x256xf32>
    %cst_38 = arith.constant 0.000000e+00 : f32
    %61 = vector.broadcast %cst_38 : f32 to vector<16x256xf32>
    %62 = arith.maximumf %60, %61 : vector<16x256xf32>
    %cst_39 = arith.constant dense<0.000000e+00> : vector<16x256xf32>
    %63 = tpu.matmul %45, %62, %cst_39 {dimension_numbers = #tpu.dot_dimension_numbers<[1], [0], [0], [1], [0, 0, 1, 1], [], []>} : vector<16x16xf32>, vector<16x256xf32>, vector<16x256xf32> -> vector<16x256xf32>
    %64 = vector.broadcast %49 : vector<16x1xf32> to vector<16x256xf32>
    %65 = arith.addf %63, %64 : vector<16x256xf32>
    %cst_40 = arith.constant dense<0.000000e+00> : vector<16x256xf32>
    %66 = tpu.matmul %46, %42, %cst_40 {dimension_numbers = #tpu.dot_dimension_numbers<[1], [0], [0], [1], [0, 0, 1, 1], [], []>} : vector<16x8xf32>, vector<8x256xf32>, vector<16x256xf32> -> vector<16x256xf32>
    %67 = arith.addf %65, %66 : vector<16x256xf32>
    %68 = vector.broadcast %50 : vector<16x1xf32> to vector<16x256xf32>
    %69 = arith.addf %67, %68 : vector<16x256xf32>
    %cst_41 = arith.constant dense<0.000000e+00> : vector<256xf32>
    %70 = vector.multi_reduction <add>, %69, %cst_41 [0] : vector<16x256xf32> to vector<256xf32>
    %71 = vector.shape_cast %70 : vector<256xf32> to vector<1x256xf32>
    %cst_42 = arith.constant 1.600000e+01 : f32
    %72 = vector.broadcast %cst_42 : f32 to vector<1x256xf32>
    %73 = arith.divf %71, %72 : vector<1x256xf32>
    %74 = vector.broadcast %73 : vector<1x256xf32> to vector<16x256xf32>
    %75 = arith.subf %69, %74 : vector<16x256xf32>
    %76 = arith.mulf %75, %75 : vector<16x256xf32>
    %cst_43 = arith.constant dense<0.000000e+00> : vector<256xf32>
    %77 = vector.multi_reduction <add>, %76, %cst_43 [0] : vector<16x256xf32> to vector<256xf32>
    %78 = vector.shape_cast %77 : vector<256xf32> to vector<1x256xf32>
    %cst_44 = arith.constant 1.600000e+01 : f32
    %79 = vector.broadcast %cst_44 : f32 to vector<1x256xf32>
    %80 = arith.divf %78, %79 : vector<1x256xf32>
    %cst_45 = arith.constant 9.99999974E-6 : f32
    %81 = vector.broadcast %cst_45 : f32 to vector<1x256xf32>
    %82 = arith.addf %80, %81 : vector<1x256xf32>
    %83 = math.rsqrt %82 : vector<1x256xf32>
    %84 = vector.broadcast %83 : vector<1x256xf32> to vector<16x256xf32>
    %85 = arith.mulf %75, %84 : vector<16x256xf32>
    %86 = vector.broadcast %51 : vector<16x1xf32> to vector<16x256xf32>
    %87 = arith.mulf %85, %86 : vector<16x256xf32>
    %88 = vector.broadcast %52 : vector<16x1xf32> to vector<16x256xf32>
    %89 = arith.addf %87, %88 : vector<16x256xf32>
    %c184_46 = arith.constant 184 : index
    %c0_47 = arith.constant 0 : index
    %90 = vector.load %arg3[%c184_46, %c0_47] : memref<592x128xf32, #tpu.memory_space<vmem>>, vector<16x16xf32>
    %c200_48 = arith.constant 200 : index
    %c0_49 = arith.constant 0 : index
    %91 = vector.load %arg3[%c200_48, %c0_49] : memref<592x128xf32, #tpu.memory_space<vmem>>, vector<32x16xf32>
    %c232 = arith.constant 232 : index
    %c0_50 = arith.constant 0 : index
    %92 = vector.load %arg3[%c232, %c0_50] : memref<592x128xf32, #tpu.memory_space<vmem>>, vector<32x32xf32>
    %c264 = arith.constant 264 : index
    %c0_51 = arith.constant 0 : index
    %93 = vector.load %arg3[%c264, %c0_51] : memref<592x128xf32, #tpu.memory_space<vmem>>, vector<32x16xf32>
    %c216 = arith.constant 216 : index
    %c0_52 = arith.constant 0 : index
    %94 = vector.load %arg4[%c216, %c0_52] : memref<736x1xf32, #tpu.memory_space<vmem>>, vector<16x1xf32>
    %c232_53 = arith.constant 232 : index
    %c0_54 = arith.constant 0 : index
    %95 = vector.load %arg4[%c232_53, %c0_54] : memref<736x1xf32, #tpu.memory_space<vmem>>, vector<32x1xf32>
    %c264_55 = arith.constant 264 : index
    %c0_56 = arith.constant 0 : index
    %96 = vector.load %arg4[%c264_55, %c0_56] : memref<736x1xf32, #tpu.memory_space<vmem>>, vector<32x1xf32>
    %c296 = arith.constant 296 : index
    %c0_57 = arith.constant 0 : index
    %97 = vector.load %arg4[%c296, %c0_57] : memref<736x1xf32, #tpu.memory_space<vmem>>, vector<32x1xf32>
    %c328 = arith.constant 328 : index
    %c0_58 = arith.constant 0 : index
    %98 = vector.load %arg4[%c328, %c0_58] : memref<736x1xf32, #tpu.memory_space<vmem>>, vector<32x1xf32>
    %c360 = arith.constant 360 : index
    %c0_59 = arith.constant 0 : index
    %99 = vector.load %arg4[%c360, %c0_59] : memref<736x1xf32, #tpu.memory_space<vmem>>, vector<32x1xf32>
    %cst_60 = arith.constant dense<0.000000e+00> : vector<16x256xf32>
    %100 = tpu.matmul %90, %89, %cst_60 {dimension_numbers = #tpu.dot_dimension_numbers<[1], [0], [0], [1], [0, 0, 1, 1], [], []>} : vector<16x16xf32>, vector<16x256xf32>, vector<16x256xf32> -> vector<16x256xf32>
    %101 = vector.broadcast %94 : vector<16x1xf32> to vector<16x256xf32>
    %102 = arith.addf %100, %101 : vector<16x256xf32>
    %cst_61 = arith.constant 0.000000e+00 : f32
    %103 = vector.broadcast %cst_61 : f32 to vector<16x256xf32>
    %104 = arith.maximumf %102, %103 : vector<16x256xf32>
    %cst_62 = arith.constant dense<0.000000e+00> : vector<32x256xf32>
    %105 = tpu.matmul %91, %104, %cst_62 {dimension_numbers = #tpu.dot_dimension_numbers<[1], [0], [0], [1], [0, 0, 1, 1], [], []>} : vector<32x16xf32>, vector<16x256xf32>, vector<32x256xf32> -> vector<32x256xf32>
    %106 = vector.broadcast %95 : vector<32x1xf32> to vector<32x256xf32>
    %107 = arith.addf %105, %106 : vector<32x256xf32>
    %cst_63 = arith.constant 0.000000e+00 : f32
    %108 = vector.broadcast %cst_63 : f32 to vector<32x256xf32>
    %109 = arith.maximumf %107, %108 : vector<32x256xf32>
    %cst_64 = arith.constant dense<0.000000e+00> : vector<32x256xf32>
    %110 = tpu.matmul %92, %109, %cst_64 {dimension_numbers = #tpu.dot_dimension_numbers<[1], [0], [0], [1], [0, 0, 1, 1], [], []>} : vector<32x32xf32>, vector<32x256xf32>, vector<32x256xf32> -> vector<32x256xf32>
    %111 = vector.broadcast %96 : vector<32x1xf32> to vector<32x256xf32>
    %112 = arith.addf %110, %111 : vector<32x256xf32>
    %cst_65 = arith.constant dense<0.000000e+00> : vector<32x256xf32>
    %113 = tpu.matmul %93, %89, %cst_65 {dimension_numbers = #tpu.dot_dimension_numbers<[1], [0], [0], [1], [0, 0, 1, 1], [], []>} : vector<32x16xf32>, vector<16x256xf32>, vector<32x256xf32> -> vector<32x256xf32>
    %114 = arith.addf %112, %113 : vector<32x256xf32>
    %115 = vector.broadcast %97 : vector<32x1xf32> to vector<32x256xf32>
    %116 = arith.addf %114, %115 : vector<32x256xf32>
    %cst_66 = arith.constant dense<0.000000e+00> : vector<256xf32>
    %117 = vector.multi_reduction <add>, %116, %cst_66 [0] : vector<32x256xf32> to vector<256xf32>
    %118 = vector.shape_cast %117 : vector<256xf32> to vector<1x256xf32>
    %cst_67 = arith.constant 3.200000e+01 : f32
    %119 = vector.broadcast %cst_67 : f32 to vector<1x256xf32>
    %120 = arith.divf %118, %119 : vector<1x256xf32>
    %121 = vector.broadcast %120 : vector<1x256xf32> to vector<32x256xf32>
    %122 = arith.subf %116, %121 : vector<32x256xf32>
    %123 = arith.mulf %122, %122 : vector<32x256xf32>
    %cst_68 = arith.constant dense<0.000000e+00> : vector<256xf32>
    %124 = vector.multi_reduction <add>, %123, %cst_68 [0] : vector<32x256xf32> to vector<256xf32>
    %125 = vector.shape_cast %124 : vector<256xf32> to vector<1x256xf32>
    %cst_69 = arith.constant 3.200000e+01 : f32
    %126 = vector.broadcast %cst_69 : f32 to vector<1x256xf32>
    %127 = arith.divf %125, %126 : vector<1x256xf32>
    %cst_70 = arith.constant 9.99999974E-6 : f32
    %128 = vector.broadcast %cst_70 : f32 to vector<1x256xf32>
    %129 = arith.addf %127, %128 : vector<1x256xf32>
    %130 = math.rsqrt %129 : vector<1x256xf32>
    %131 = vector.broadcast %130 : vector<1x256xf32> to vector<32x256xf32>
    %132 = arith.mulf %122, %131 : vector<32x256xf32>
    %133 = vector.broadcast %98 : vector<32x1xf32> to vector<32x256xf32>
    %134 = arith.mulf %132, %133 : vector<32x256xf32>
    %135 = vector.broadcast %99 : vector<32x1xf32> to vector<32x256xf32>
    %136 = arith.addf %134, %135 : vector<32x256xf32>
    %c296_71 = arith.constant 296 : index
    %c0_72 = arith.constant 0 : index
    %137 = vector.load %arg3[%c296_71, %c0_72] : memref<592x128xf32, #tpu.memory_space<vmem>>, vector<128x128xf32>
    %c424 = arith.constant 424 : index
    %c0_73 = arith.constant 0 : index
    %138 = vector.load %arg3[%c424, %c0_73] : memref<592x128xf32, #tpu.memory_space<vmem>>, vector<16x128xf32>
    %c440 = arith.constant 440 : index
    %c0_74 = arith.constant 0 : index
    %139 = vector.load %arg3[%c440, %c0_74] : memref<592x128xf32, #tpu.memory_space<vmem>>, vector<16x16xf32>
    %c456 = arith.constant 456 : index
    %c0_75 = arith.constant 0 : index
    %140 = vector.load %arg3[%c456, %c0_75] : memref<592x128xf32, #tpu.memory_space<vmem>>, vector<16x128xf32>
    %c392 = arith.constant 392 : index
    %c0_76 = arith.constant 0 : index
    %141 = vector.load %arg4[%c392, %c0_76] : memref<736x1xf32, #tpu.memory_space<vmem>>, vector<128x1xf32>
    %c520 = arith.constant 520 : index
    %c0_77 = arith.constant 0 : index
    %142 = vector.load %arg4[%c520, %c0_77] : memref<736x1xf32, #tpu.memory_space<vmem>>, vector<16x1xf32>
    %c536 = arith.constant 536 : index
    %c0_78 = arith.constant 0 : index
    %143 = vector.load %arg4[%c536, %c0_78] : memref<736x1xf32, #tpu.memory_space<vmem>>, vector<16x1xf32>
    %c552 = arith.constant 552 : index
    %c0_79 = arith.constant 0 : index
    %144 = vector.load %arg4[%c552, %c0_79] : memref<736x1xf32, #tpu.memory_space<vmem>>, vector<16x1xf32>
    %c568 = arith.constant 568 : index
    %c0_80 = arith.constant 0 : index
    %145 = vector.load %arg4[%c568, %c0_80] : memref<736x1xf32, #tpu.memory_space<vmem>>, vector<16x1xf32>
    %c584 = arith.constant 584 : index
    %c0_81 = arith.constant 0 : index
    %146 = vector.load %arg4[%c584, %c0_81] : memref<736x1xf32, #tpu.memory_space<vmem>>, vector<16x1xf32>
    %147 = tpu.concatenate %136, %19, %41, %136 in 0 : vector<32x256xf32>, vector<32x256xf32>, vector<32x256xf32>, vector<32x256xf32> -> vector<128x256xf32>
    %cst_82 = arith.constant dense<0.000000e+00> : vector<128x256xf32>
    %148 = tpu.matmul %137, %147, %cst_82 {dimension_numbers = #tpu.dot_dimension_numbers<[1], [0], [0], [1], [0, 0, 1, 1], [], []>} : vector<128x128xf32>, vector<128x256xf32>, vector<128x256xf32> -> vector<128x256xf32>
    %149 = vector.broadcast %141 : vector<128x1xf32> to vector<128x256xf32>
    %150 = arith.addf %148, %149 : vector<128x256xf32>
    %cst_83 = arith.constant 0.000000e+00 : f32
    %151 = vector.broadcast %cst_83 : f32 to vector<128x256xf32>
    %152 = arith.maximumf %150, %151 : vector<128x256xf32>
    %cst_84 = arith.constant dense<0.000000e+00> : vector<16x256xf32>
    %153 = tpu.matmul %138, %152, %cst_84 {dimension_numbers = #tpu.dot_dimension_numbers<[1], [0], [0], [1], [0, 0, 1, 1], [], []>} : vector<16x128xf32>, vector<128x256xf32>, vector<16x256xf32> -> vector<16x256xf32>
    %154 = vector.broadcast %142 : vector<16x1xf32> to vector<16x256xf32>
    %155 = arith.addf %153, %154 : vector<16x256xf32>
    %cst_85 = arith.constant 0.000000e+00 : f32
    %156 = vector.broadcast %cst_85 : f32 to vector<16x256xf32>
    %157 = arith.maximumf %155, %156 : vector<16x256xf32>
    %cst_86 = arith.constant dense<0.000000e+00> : vector<16x256xf32>
    %158 = tpu.matmul %139, %157, %cst_86 {dimension_numbers = #tpu.dot_dimension_numbers<[1], [0], [0], [1], [0, 0, 1, 1], [], []>} : vector<16x16xf32>, vector<16x256xf32>, vector<16x256xf32> -> vector<16x256xf32>
    %159 = vector.broadcast %143 : vector<16x1xf32> to vector<16x256xf32>
    %160 = arith.addf %158, %159 : vector<16x256xf32>
    %cst_87 = arith.constant dense<0.000000e+00> : vector<16x256xf32>
    %161 = tpu.matmul %140, %147, %cst_87 {dimension_numbers = #tpu.dot_dimension_numbers<[1], [0], [0], [1], [0, 0, 1, 1], [], []>} : vector<16x128xf32>, vector<128x256xf32>, vector<16x256xf32> -> vector<16x256xf32>
    %162 = arith.addf %160, %161 : vector<16x256xf32>
    %163 = vector.broadcast %144 : vector<16x1xf32> to vector<16x256xf32>
    %164 = arith.addf %162, %163 : vector<16x256xf32>
    %cst_88 = arith.constant dense<0.000000e+00> : vector<256xf32>
    %165 = vector.multi_reduction <add>, %164, %cst_88 [0] : vector<16x256xf32> to vector<256xf32>
    %166 = vector.shape_cast %165 : vector<256xf32> to vector<1x256xf32>
    %cst_89 = arith.constant 1.600000e+01 : f32
    %167 = vector.broadcast %cst_89 : f32 to vector<1x256xf32>
    %168 = arith.divf %166, %167 : vector<1x256xf32>
    %169 = vector.broadcast %168 : vector<1x256xf32> to vector<16x256xf32>
    %170 = arith.subf %164, %169 : vector<16x256xf32>
    %171 = arith.mulf %170, %170 : vector<16x256xf32>
    %cst_90 = arith.constant dense<0.000000e+00> : vector<256xf32>
    %172 = vector.multi_reduction <add>, %171, %cst_90 [0] : vector<16x256xf32> to vector<256xf32>
    %173 = vector.shape_cast %172 : vector<256xf32> to vector<1x256xf32>
    %cst_91 = arith.constant 1.600000e+01 : f32
    %174 = vector.broadcast %cst_91 : f32 to vector<1x256xf32>
    %175 = arith.divf %173, %174 : vector<1x256xf32>
    %cst_92 = arith.constant 9.99999974E-6 : f32
    %176 = vector.broadcast %cst_92 : f32 to vector<1x256xf32>
    %177 = arith.addf %175, %176 : vector<1x256xf32>
    %178 = math.rsqrt %177 : vector<1x256xf32>
    %179 = vector.broadcast %178 : vector<1x256xf32> to vector<16x256xf32>
    %180 = arith.mulf %170, %179 : vector<16x256xf32>
    %181 = vector.broadcast %145 : vector<16x1xf32> to vector<16x256xf32>
    %182 = arith.mulf %180, %181 : vector<16x256xf32>
    %183 = vector.broadcast %146 : vector<16x1xf32> to vector<16x256xf32>
    %184 = arith.addf %182, %183 : vector<16x256xf32>
    %c472 = arith.constant 472 : index
    %c0_93 = arith.constant 0 : index
    %185 = vector.load %arg3[%c472, %c0_93] : memref<592x128xf32, #tpu.memory_space<vmem>>, vector<96x96xf32>
    %c568_94 = arith.constant 568 : index
    %c0_95 = arith.constant 0 : index
    %186 = vector.load %arg3[%c568_94, %c0_95] : memref<592x128xf32, #tpu.memory_space<vmem>>, vector<8x96xf32>
    %c576 = arith.constant 576 : index
    %c0_96 = arith.constant 0 : index
    %187 = vector.load %arg3[%c576, %c0_96] : memref<592x128xf32, #tpu.memory_space<vmem>>, vector<8x8xf32>
    %c584_97 = arith.constant 584 : index
    %c0_98 = arith.constant 0 : index
    %188 = vector.load %arg3[%c584_97, %c0_98] : memref<592x128xf32, #tpu.memory_space<vmem>>, vector<8x96xf32>
    %c600 = arith.constant 600 : index
    %c0_99 = arith.constant 0 : index
    %189 = vector.load %arg4[%c600, %c0_99] : memref<736x1xf32, #tpu.memory_space<vmem>>, vector<96x1xf32>
    %c696 = arith.constant 696 : index
    %c0_100 = arith.constant 0 : index
    %190 = vector.load %arg4[%c696, %c0_100] : memref<736x1xf32, #tpu.memory_space<vmem>>, vector<8x1xf32>
    %c704 = arith.constant 704 : index
    %c0_101 = arith.constant 0 : index
    %191 = vector.load %arg4[%c704, %c0_101] : memref<736x1xf32, #tpu.memory_space<vmem>>, vector<8x1xf32>
    %c712 = arith.constant 712 : index
    %c0_102 = arith.constant 0 : index
    %192 = vector.load %arg4[%c712, %c0_102] : memref<736x1xf32, #tpu.memory_space<vmem>>, vector<8x1xf32>
    %193 = tpu.concatenate %184, %19, %41, %89 in 0 : vector<16x256xf32>, vector<32x256xf32>, vector<32x256xf32>, vector<16x256xf32> -> vector<96x256xf32>
    %cst_103 = arith.constant dense<0.000000e+00> : vector<96x256xf32>
    %194 = tpu.matmul %185, %193, %cst_103 {dimension_numbers = #tpu.dot_dimension_numbers<[1], [0], [0], [1], [0, 0, 1, 1], [], []>} : vector<96x96xf32>, vector<96x256xf32>, vector<96x256xf32> -> vector<96x256xf32>
    %195 = vector.broadcast %189 : vector<96x1xf32> to vector<96x256xf32>
    %196 = arith.addf %194, %195 : vector<96x256xf32>
    %cst_104 = arith.constant 0.000000e+00 : f32
    %197 = vector.broadcast %cst_104 : f32 to vector<96x256xf32>
    %198 = arith.maximumf %196, %197 : vector<96x256xf32>
    %cst_105 = arith.constant dense<0.000000e+00> : vector<8x256xf32>
    %199 = tpu.matmul %186, %198, %cst_105 {dimension_numbers = #tpu.dot_dimension_numbers<[1], [0], [0], [1], [0, 0, 1, 1], [], []>} : vector<8x96xf32>, vector<96x256xf32>, vector<8x256xf32> -> vector<8x256xf32>
    %200 = vector.broadcast %190 : vector<8x1xf32> to vector<8x256xf32>
    %201 = arith.addf %199, %200 : vector<8x256xf32>
    %cst_106 = arith.constant 0.000000e+00 : f32
    %202 = vector.broadcast %cst_106 : f32 to vector<8x256xf32>
    %203 = arith.maximumf %201, %202 : vector<8x256xf32>
    %cst_107 = arith.constant dense<0.000000e+00> : vector<8x256xf32>
    %204 = tpu.matmul %187, %203, %cst_107 {dimension_numbers = #tpu.dot_dimension_numbers<[1], [0], [0], [1], [0, 0, 1, 1], [], []>} : vector<8x8xf32>, vector<8x256xf32>, vector<8x256xf32> -> vector<8x256xf32>
    %205 = vector.broadcast %191 : vector<8x1xf32> to vector<8x256xf32>
    %206 = arith.addf %204, %205 : vector<8x256xf32>
    %cst_108 = arith.constant dense<0.000000e+00> : vector<8x256xf32>
    %207 = tpu.matmul %188, %193, %cst_108 {dimension_numbers = #tpu.dot_dimension_numbers<[1], [0], [0], [1], [0, 0, 1, 1], [], []>} : vector<8x96xf32>, vector<96x256xf32>, vector<8x256xf32> -> vector<8x256xf32>
    %208 = arith.addf %206, %207 : vector<8x256xf32>
    %209 = vector.broadcast %192 : vector<8x1xf32> to vector<8x256xf32>
    %210 = arith.addf %208, %209 : vector<8x256xf32>
    %c0_109 = arith.constant 0 : index
    %c0_110 = arith.constant 0 : index
    %211 = vector.load %arg5[%c0_109, %c0_110] : memref<8x256xf32, #tpu.memory_space<vmem>>, vector<8x256xf32>
    tpu.vector_store %arg5[%c0_109, %c0_110], %210 {strides = array<i32>} : memref<8x256xf32, #tpu.memory_space<vmem>>, vector<8x256xf32>,
    return
  }
  func.func @transform_0(%arg0: i32) -> (i32, i32) {
    %c0_i32 = arith.constant 0 : i32
    %c0_i32_0 = arith.constant 0 : i32
    return %c0_i32, %arg0 : i32, i32
  }
  func.func @transform_1(%arg0: i32) -> (i32, i32) {
    %c0_i32 = arith.constant 0 : i32
    %c0_i32_0 = arith.constant 0 : i32
    return %c0_i32, %arg0 : i32, i32
  }
  func.func @transform_2(%arg0: i32) -> (i32, i32) {
    %c0_i32 = arith.constant 0 : i32
    %c0_i32_0 = arith.constant 0 : i32
    %c0_i32_1 = arith.constant 0 : i32
    return %c0_i32, %c0_i32_0 : i32, i32
  }
  func.func @transform_3(%arg0: i32) -> (i32, i32) {
    %c0_i32 = arith.constant 0 : i32
    %c0_i32_0 = arith.constant 0 : i32
    %c0_i32_1 = arith.constant 0 : i32
    return %c0_i32, %c0_i32_0 : i32, i32
  }
  func.func @transform_4(%arg0: i32) -> (i32, i32) {
    %c0_i32 = arith.constant 0 : i32
    %c0_i32_0 = arith.constant 0 : i32
    return %c0_i32, %arg0 : i32, i32
  }
}

</mosaic_0001>

<llo_original>
// kernel: forward.1
$region0: #{forward.1}
  #allocation0 [shape = 'u32[]', space=smem, size = 0x4, offset = 0x4, fixed_abs, tag = 'smem constant byte address 0x4 - core index']
  #allocation1 [shape = 'u32[72,128]{1,0:T(1,128)}', space=vmem, size = 0x9000, scoped, tag = 'internal scratch']
  %s0 = inlined_call_operand.vmem [shape: f32[8,512], index: 0, kind: input, shape index: {}]
  %s1 = inlined_call_operand.vmem [shape: f32[8,512], index: 1, kind: input, shape index: {}]
  %s2 = inlined_call_operand.vmem [shape: f32[592,128], index: 2, kind: input, shape index: {}]
  %s3 = inlined_call_operand.vmem [shape: f32[736,1], index: 3, kind: input, shape index: {}]
  %s4 = inlined_call_operand.hbm [shape: f32[8,512], index: 4, kind: output, shape index: {}]
  %s5 = sld [smem:[#allocation0]]
  $region49: #{forward.1} parent=0
    _
  %s7 = ssub.s32 1, %s5
  %s8 = scalar_select 0, %s7, %s5
  $region1: #{forward.1} parent=0
    #allocation2 [shape = 'u8[16384]{0}', space=vmem, size = 0x4000, scoped, tag = 'output window, operand 0']
    #allocation3 [shape = 's32[2]{0}', space=sflag, size = 0x8, scoped, tag = 'scoped memory for forward.1']
    %9 = vsyncpa [#allocation3], 0
    %s10 = scalar_lea.sflag [#allocation3], 1
    %11 = vsyncpa %s10, 0
    loop: start=0, step=1, limit=4
    $region2: #{forward.1} parent=1 // loop_pre_header
      _
    $region3: #{forward.1} parent=1 // loop_header
      %s13 = sphi 0, %s17
      %p14 = scmp.ge.s32.totalorder %s13, 4
      %s23 = sphi 0, %s25
      %s26 = sphi 0, %s23
      %s27 = sphi 0, %s26
      %s43 = sphi 0, %s27
      %s49 = sphi 0, %s51
      %s52 = sphi 0, %s49
      %s53 = sphi 0, %s52
      %s69 = sphi 0, %s53
      %s73 = sphi 0, %s73
      %s75 = sphi 0, %s73
      %s76 = sphi 0, %s75
      %s90 = sphi 0, %s76
      %s94 = sphi 0, %s94
      %s96 = sphi 0, %s94
      %s97 = sphi 0, %s96
      %s111 = sphi 0, %s97
      %s117 = sphi 0, %s119
      %s120 = sphi 0, %s117
      %s121 = sphi 0, %s120
      %s137 = sphi 0, %s121
    $region4: #{forward.1} parent=1 // loop_header_branch
      %16 = sbr.rel (%p14) target = $region8
    $region5: #{forward.1} parent=1 // loop_body
      %s18 = ssub.s32 %s13, 1
      %s19 = ssub.s32 %s13, 2
      %s20 = sadd.s32 %s13, 1
      %s21 = ssub.s32 %s13, %s20
      %p22 = scmp.eq.s32.totalorder %s21, 0
      %s24 = sadd.s32 %s23, 1
      %s25 = scalar_select %p22, %s23, %s24
      %p28 = pneg %p22
      %p29 = scmp.eq.s32.totalorder %s13, 1
      %p30 = por %p28, %p29
      %p31 = scmp.ne.s32.totalorder %s23, %s26
      %p32 = scmp.eq.s32.totalorder %s13, 0
      %p33 = por %p31, %p32
      %p34 = scmp.ne.s32.totalorder %s23, %s26
      %p35 = scmp.eq.s32.totalorder %s18, 1
      %p36 = por %p34, %p35
      %p37 = scmp.ne.s32.totalorder %s26, %s27
      %p38 = scmp.eq.s32.totalorder %s18, 0
      %p39 = por %p37, %p38
      %p40 = scmp.ne.s32.totalorder %s26, %s27
      %p41 = scmp.eq.s32.totalorder %s19, 1
      %p42 = por %p40, %p41
      %p44 = scmp.ne.s32.totalorder %s27, %s43
      %p45 = scmp.eq.s32.totalorder %s19, 0
      %p46 = por %p44, %p45
      %s47 = ssub.s32 %s13, %s20
      %p48 = scmp.eq.s32.totalorder %s47, 0
      %s50 = sadd.s32 %s49, 1
      %s51 = scalar_select %p48, %s49, %s50
      %p54 = pneg %p48
      %p55 = scmp.eq.s32.totalorder %s13, 1
      %p56 = por %p54, %p55
      %p57 = scmp.ne.s32.totalorder %s49, %s52
      %p58 = scmp.eq.s32.totalorder %s13, 0
      %p59 = por %p57, %p58
      %p60 = scmp.ne.s32.totalorder %s49, %s52
      %p61 = scmp.eq.s32.totalorder %s18, 1
      %p62 = por %p60, %p61
      %p63 = scmp.ne.s32.totalorder %s52, %s53
      %p64 = scmp.eq.s32.totalorder %s18, 0
      %p65 = por %p63, %p64
      %p66 = scmp.ne.s32.totalorder %s52, %s53
      %p67 = scmp.eq.s32.totalorder %s19, 1
      %p68 = por %p66, %p67
      %p70 = scmp.ne.s32.totalorder %s53, %s69
      %p71 = scmp.eq.s32.totalorder %s19, 0
      %p72 = por %p70, %p71
      %s74 = sadd.s32 %s73, 1
      %p77 = scmp.eq.s32.totalorder %s13, 1
      %p78 = scmp.ne.s32.totalorder %s73, %s75
      %p79 = scmp.eq.s32.totalorder %s13, 0
      %p80 = por %p78, %p79
      %p81 = scmp.ne.s32.totalorder %s73, %s75
      %p82 = scmp.eq.s32.totalorder %s18, 1
      %p83 = por %p81, %p82
      %p84 = scmp.ne.s32.totalorder %s75, %s76
      %p85 = scmp.eq.s32.totalorder %s18, 0
      %p86 = por %p84, %p85
      %p87 = scmp.ne.s32.totalorder %s75, %s76
      %p88 = scmp.eq.s32.totalorder %s19, 1
      %p89 = por %p87, %p88
      %p91 = scmp.ne.s32.totalorder %s76, %s90
      %p92 = scmp.eq.s32.totalorder %s19, 0
      %p93 = por %p91, %p92
      %s95 = sadd.s32 %s94, 1
      %p98 = scmp.eq.s32.totalorder %s13, 1
      %p99 = scmp.ne.s32.totalorder %s94, %s96
      %p100 = scmp.eq.s32.totalorder %s13, 0
      %p101 = por %p99, %p100
      %p102 = scmp.ne.s32.totalorder %s94, %s96
      %p103 = scmp.eq.s32.totalorder %s18, 1
      %p104 = por %p102, %p103
      %p105 = scmp.ne.s32.totalorder %s96, %s97
      %p106 = scmp.eq.s32.totalorder %s18, 0
      %p107 = por %p105, %p106
      %p108 = scmp.ne.s32.totalorder %s96, %s97
      %p109 = scmp.eq.s32.totalorder %s19, 1
      %p110 = por %p108, %p109
      %p112 = scmp.ne.s32.totalorder %s97, %s111
      %p113 = scmp.eq.s32.totalorder %s19, 0
      %p114 = por %p112, %p113
      %s115 = ssub.s32 %s13, %s20
      %p116 = scmp.eq.s32.totalorder %s115, 0
      %s118 = sadd.s32 %s117, 1
      %s119 = scalar_select %p116, %s117, %s118
      %p122 = pneg %p116
      %p123 = scmp.eq.s32.totalorder %s13, 1
      %p124 = por %p122, %p123
      %p125 = scmp.ne.s32.totalorder %s117, %s120
      %p126 = scmp.eq.s32.totalorder %s13, 0
      %p127 = por %p125, %p126
      %p128 = scmp.ne.s32.totalorder %s117, %s120
      %p129 = scmp.eq.s32.totalorder %s18, 1
      %p130 = por %p128, %p129
      %p131 = scmp.ne.s32.totalorder %s120, %s121
      %p132 = scmp.eq.s32.totalorder %s18, 0
      %p133 = por %p131, %p132
      %p134 = scmp.ne.s32.totalorder %s120, %s121
      %p135 = scmp.eq.s32.totalorder %s19, 1
      %p136 = por %p134, %p135
      %p138 = scmp.ne.s32.totalorder %s121, %s137
      %p139 = scmp.eq.s32.totalorder %s19, 0
      %p140 = por %p138, %p139
      %p141 = scmp.le.s32.totalorder 1, %s13
      %p142 = scmp.lt.s32.totalorder %s13, 3
      %p143 = pnand %p141, %p142
      %p144 = pneg %p143
      // Predicated region
      $region9: #{forward.1} parent=5 // pred_check
        _
      $region10: #{forward.1} parent=5 // pred_check_branch
        %146 = sbr.rel (%p143) target = $region12
      $region11: #{forward.1} parent=5 // pred_region
        %s147 = ssub.s32 %s13, 1
        // Predicated region
        $region13: #{forward.1} parent=11 // pred_check
          %p148 = pneg %p86
        $region14: #{forward.1} parent=11 // pred_check_branch
          %150 = sbr.rel (%p148) target = $region16
        $region15: #{forward.1} parent=11 // pred_region
          _
        $region16: #{forward.1} parent=11 // pred_fallthru
          _
        // Predicated region
        $region17: #{forward.1} parent=11 // pred_check
          %p151 = pneg %p107
        $region18: #{forward.1} parent=11 // pred_check_branch
          %153 = sbr.rel (%p151) target = $region20
        $region19: #{forward.1} parent=11 // pred_region
          _
        $region20: #{forward.1} parent=11 // pred_fallthru
          _
      $region12: #{forward.1} parent=5 // pred_fallthru
        _
      %p154 = scmp.lt.s32.totalorder %s13, 2
      // Predicated region
      $region21: #{forward.1} parent=5 // pred_check
        %p155 = pneg %p154
      $region22: #{forward.1} parent=5 // pred_check_branch
        %157 = sbr.rel (%p155) target = $region24
      $region23: #{forward.1} parent=5 // pred_region
        // Predicated region
        $region25: #{forward.1} parent=23 // pred_check
          %p158 = pneg %p33
        $region26: #{forward.1} parent=23 // pred_check_branch
          %160 = sbr.rel (%p158) target = $region28
        $region27: #{forward.1} parent=23 // pred_region
          %s161 = smul.u32 2, %s13
          %p162 = scmp.lt.s32.totalorder %s161, 3
          %s163 = scalar_select %p162, %s161, 3
          %s164 = smul.addr %s163, 8
          %s165 = scalar_lea.vmem %s0, %s164
          %s166 = smul.u32 2, %s13
        $region28: #{forward.1} parent=23 // pred_fallthru
          _
        // Predicated region
        $region29: #{forward.1} parent=23 // pred_check
          %p167 = pneg %p59
        $region30: #{forward.1} parent=23 // pred_check_branch
          %169 = sbr.rel (%p167) target = $region32
        $region31: #{forward.1} parent=23 // pred_region
          %s170 = smul.u32 2, %s13
          %p171 = scmp.lt.s32.totalorder %s170, 3
          %s172 = scalar_select %p171, %s170, 3
          %s173 = smul.addr %s172, 8
          %s174 = scalar_lea.vmem %s1, %s173
          %s175 = smul.u32 2, %s13
        $region32: #{forward.1} parent=23 // pred_fallthru
          _
      $region24: #{forward.1} parent=5 // pred_fallthru
        _
      %p176 = scmp.le.s32.totalorder 1, %s13
      %p177 = scmp.lt.s32.totalorder %s13, 3
      %p178 = pnand %p176, %p177
      %p179 = pneg %p178
      // Predicated region
      $region33: #{forward.1} parent=5 // pred_check
        _
      $region34: #{forward.1} parent=5 // pred_check_branch
        %181 = sbr.rel (%p178) target = $region36
      $region35: #{forward.1} parent=5 // pred_region
        %s182 = ssub.s32 %s13, 1
        %s183 = smul.u32 2, %s18
        %p184 = scmp.lt.s32.totalorder %s183, 3
        %s185 = scalar_select %p184, %s183, 3
        %s186 = smul.addr %s185, 8
        %s187 = scalar_lea.vmem %s0, %s186
        %p188 = pneg %p39
        %p189 = pneg %p36
        %s190 = smul.u32 2, %s18
        %p191 = scmp.lt.s32.totalorder %s190, 3
        %s192 = scalar_select %p191, %s190, 3
        %s193 = smul.addr %s192, 8
        %s194 = scalar_lea.vmem %s1, %s193
        %p195 = pneg %p65
        %p196 = pneg %p62
        %p197 = pneg %p86
        %p198 = pneg %p83
        %p199 = pneg %p107
        %p200 = pneg %p104
        %p201 = pneg %p133
        %p202 = pneg %p130
        %s203 = sand.u32 %s120, 1
        %s204 = scalar_lea.sflag [#allocation3], %s203
        %s205 = sand.u32 %s120, 1
        %s206 = smul.addr %s205, 16
        %s207 = scalar_lea.vmem [#allocation2], %s206
        %s208 = smul.u32 2, %s18
        %p209 = scmp.lt.s32.totalorder %s208, 3
        %s210 = scalar_select %p209, %s208, 3
        %s211 = smul.addr %s210, 8
        %s212 = scalar_lea.vmem %s0, %s211
        %s213 = smul.u32 2, %s18
        %s214 = smul.u32 2, %s18
        %p215 = scmp.lt.s32.totalorder %s214, 3
        %s216 = scalar_select %p215, %s214, 3
        %s217 = smul.addr %s216, 8
        %s218 = scalar_lea.vmem %s1, %s217
        %s219 = smul.u32 2, %s18
        %s220 = smul.u32 2, %s18
        %v221 = vld [vmem:[%s218] sm:$0xff]
        %v222 = vld [vmem:[%s218 + $0x8] sm:$0xff]
        %v223 = vadd.f32 %v221, 1.0
        %v224 = vadd.f32 %v222, 1.0
        %v225 = vrcp.pop 1000.0
        %v226 = vmul.f32 1000.0, %v225
        %v227 = vsub.f32 1.0, %v226
        %v228 = vmul.f32 %v225, %v227
        %v229 = vadd.f32 %v225, %v228
        %vm230 = vweird.f32 %v225
        %v231 = vsel %vm230, %v225, %v229
        %v232 = vmul.f32 %v223, %v231
        %v233 = vmul.f32 %v224, %v231
        %v234 = vld [vmem:[%s2] sm:$0xff]
        %v235 = vld [vmem:[%s2 + $0x8] sm:$0xff]
        %v236 = vld [vmem:[%s2 + $0x10] sm:$0xff]
        %v237 = vld [vmem:[%s2 + $0x18] sm:$0xff]
        %v238 = vld [vmem:[%s2 + $0x20] sm:$0xff]
        %v239 = vld [vmem:[%s2 + $0x28] sm:$0xff]
        %v240 = vld [vmem:[%s2 + $0x30] sm:$0xff]
        %v241 = vld [vmem:[%s2 + $0x38] sm:$0xff]
        %v242 = vld [vmem:[%s3] sm:$0xff]
        %v243 = vld [vmem:[%s3 + $0x8] sm:$0xff]
        %v244 = vld [vmem:[%s3 + $0x10] sm:$0xff]
        %v245 = vld [vmem:[%s3 + $0x18] sm:$0xff]
        %v246 = vld [vmem:[%s3 + $0x20] sm:$0xff]
        %v247 = vld [vmem:[%s3 + $0x28] sm:$0xff]
        %v248 = vld [vmem:[%s3 + $0x30] sm:$0xff]
        %v249 = vld [vmem:[%s3 + $0x38] sm:$0xff]
        %251 = vset.pattern.permute.xlu0 0
        %252 = vperm.xlu0 %251, %v234
        %v253 = vpop.permute.xlu0 %252
        %256 = vset.pattern.permute.xlu0 0
        %257 = vperm.xlu0 %256, %v235
        %v258 = vpop.permute.xlu0 %257
        %261 = vset.pattern.permute.xlu0 0
        %262 = vperm.xlu0 %261, %v236
        %v263 = vpop.permute.xlu0 %262
        %266 = vset.pattern.permute.xlu0 0
        %267 = vperm.xlu0 %266, %v237
        %v268 = vpop.permute.xlu0 %267
        %v270 = vperm.slane %v232, 0
        %v271 = vperm.slane %v233, 0
        %v272 = vmul.f32 %v253, %v270
        %v273 = vmul.f32 %v253, %v271
        %v274 = vmul.f32 %v258, %v270
        %v275 = vmul.f32 %v258, %v271
        %v276 = vmul.f32 %v263, %v270
        %v277 = vmul.f32 %v263, %v271
        %v278 = vmul.f32 %v268, %v270
        %v279 = vmul.f32 %v268, %v271
        %281 = vset.pattern.permute.xlu0 0
        %282 = vperm.xlu0 %281, %v242
        %v283 = vpop.permute.xlu0 %282
        %286 = vset.pattern.permute.xlu0 0
        %287 = vperm.xlu0 %286, %v243
        %v288 = vpop.permute.xlu0 %287
        %291 = vset.pattern.permute.xlu0 0
        %292 = vperm.xlu0 %291, %v244
        %v293 = vpop.permute.xlu0 %292
        %296 = vset.pattern.permute.xlu0 0
        %297 = vperm.xlu0 %296, %v245
        %v298 = vpop.permute.xlu0 %297
        %v300 = vadd.f32 %v272, %v283
        %v301 = vadd.f32 %v273, %v283
        %v302 = vadd.f32 %v274, %v288
        %v303 = vadd.f32 %v275, %v288
        %v304 = vadd.f32 %v276, %v293
        %v305 = vadd.f32 %v277, %v293
        %v306 = vadd.f32 %v278, %v298
        %v307 = vadd.f32 %v279, %v298
        %v308 = vmax.f32 %v300, 0.0
        %v309 = vmax.f32 %v301, 0.0
        %v310 = vmax.f32 %v302, 0.0
        %v311 = vmax.f32 %v303, 0.0
        %v312 = vmax.f32 %v304, 0.0
        %v313 = vmax.f32 %v305, 0.0
        %v314 = vmax.f32 %v306, 0.0
        %v315 = vmax.f32 %v307, 0.0
        %317 = vset.pattern.permute.xlu0 0
        %318 = vperm.xlu0 %317, %v246
        %v319 = vpop.permute.xlu0 %318
        %322 = vset.pattern.permute.xlu0 0
        %323 = vperm.xlu0 %322, %v247
        %v324 = vpop.permute.xlu0 %323
        %327 = vset.pattern.permute.xlu0 0
        %328 = vperm.xlu0 %327, %v248
        %v329 = vpop.permute.xlu0 %328
        %332 = vset.pattern.permute.xlu0 0
        %333 = vperm.xlu0 %332, %v249
        %v334 = vpop.permute.xlu0 %333
        %vm336 = vcmask 261120
        %v338 = vsel %vm336, %v238, 0
        %v341 = vsel %vm336, %v239, 0
        %v344 = vsel %vm336, %v240, 0
        %v347 = vsel %vm336, %v241, 0
        %349 = vmatpush.msra.mxu0 0.0
        %350 = vmatpush.msra.mxu0 0.0
        %351 = vmatpush.msra.mxu0 0.0
        %352 = vmatpush.msra.mxu0 0.0
        %353 = vmatpush.msra.mxu0 0.0
        %354 = vmatpush.msra.mxu0 0.0
        %355 = vmatpush.msra.mxu0 0.0
        %356 = vmatpush.msra.mxu0 0.0
        %357 = vmatpush.msra.mxu0 0.0
        %358 = vmatpush.msra.mxu0 0.0
        %359 = vmatpush.msra.mxu0 0.0
        %360 = vmatpush.msra.mxu0 0.0
        %361 = vmatpush.msra.mxu0 %v314
        %362 = vmatpush.msra.mxu0 %v312
        %363 = vmatpush.msra.mxu0 %v310
        %364 = vmatpush.msra.mxu0 %v308
        %365 = vmatmul.f32.gmra.mxu0 %v338
        %v366 = vpop.f32.mrf.mxu0
        %v367 = vadd.f32 %v319, %v366
        %368 = vmatmul.f32.gmra.mxu0 %v341
        %v369 = vpop.f32.mrf.mxu0
        %v370 = vadd.f32 %v324, %v369
        %371 = vmatmul.f32.gmra.mxu0 %v344
        %v372 = vpop.f32.mrf.mxu0
        %v373 = vadd.f32 %v329, %v372
        %374 = vmatmul.f32.gmra.mxu0 %v347
        %v375 = vpop.f32.mrf.mxu0
        %v376 = vadd.f32 %v334, %v375
        %377 = vdwg.mxu0
        %378 = vmatpush.msra.mxu0 0.0
        %379 = vmatpush.msra.mxu0 0.0
        %380 = vmatpush.msra.mxu0 0.0
        %381 = vmatpush.msra.mxu0 0.0
        %382 = vmatpush.msra.mxu0 0.0
        %383 = vmatpush.msra.mxu0 0.0
        %384 = vmatpush.msra.mxu0 0.0
        %385 = vmatpush.msra.mxu0 0.0
        %386 = vmatpush.msra.mxu0 0.0
        %387 = vmatpush.msra.mxu0 0.0
        %388 = vmatpush.msra.mxu0 0.0
        %389 = vmatpush.msra.mxu0 0.0
        %390 = vmatpush.msra.mxu0 %v315
        %391 = vmatpush.msra.mxu0 %v313
        %392 = vmatpush.msra.mxu0 %v311
        %393 = vmatpush.msra.mxu0 %v309
        %394 = vmatmul.f32.gmra.mxu0 %v338
        %v395 = vpop.f32.mrf.mxu0
        %v396 = vadd.f32 %v319, %v395
        %397 = vmatmul.f32.gmra.mxu0 %v341
        %v398 = vpop.f32.mrf.mxu0
        %v399 = vadd.f32 %v324, %v398
        %400 = vmatmul.f32.gmra.mxu0 %v344
        %v401 = vpop.f32.mrf.mxu0
        %v402 = vadd.f32 %v329, %v401
        %403 = vmatmul.f32.gmra.mxu0 %v347
        %v404 = vpop.f32.mrf.mxu0
        %v405 = vadd.f32 %v334, %v404
        %406 = vdwg.mxu0
        %v407 = vld [vmem:[%s2 + $0x40] sm:$0xff]
        %v408 = vld [vmem:[%s2 + $0x48] sm:$0xff]
        %v409 = vld [vmem:[%s2 + $0x50] sm:$0xff]
        %v410 = vld [vmem:[%s2 + $0x58] sm:$0xff]
        %v411 = vld [vmem:[%s2 + $0x60] sm:$0xff]
        %v412 = vld [vmem:[%s2 + $0x68] sm:$0xff]
        %v413 = vld [vmem:[%s2 + $0x70] sm:$0xff]
        %v414 = vld [vmem:[%s2 + $0x78] sm:$0xff]
        %v415 = vld [vmem:[%s3 + $0x40] sm:$0xff]
        %v416 = vld [vmem:[%s3 + $0x48] sm:$0xff]
        %v417 = vld [vmem:[%s3 + $0x50] sm:$0xff]
        %v418 = vld [vmem:[%s3 + $0x58] sm:$0xff]
        %v419 = vld [vmem:[%s3 + $0x60] sm:$0xff]
        %v420 = vld [vmem:[%s3 + $0x68] sm:$0xff]
        %v421 = vld [vmem:[%s3 + $0x70] sm:$0xff]
        %v422 = vld [vmem:[%s3 + $0x78] sm:$0xff]
        %424 = vset.pattern.permute.xlu0 0
        %425 = vperm.xlu0 %424, %v407
        %v426 = vpop.permute.xlu0 %425
        %429 = vset.pattern.permute.xlu0 0
        %430 = vperm.xlu0 %429, %v408
        %v431 = vpop.permute.xlu0 %430
        %434 = vset.pattern.permute.xlu0 0
        %435 = vperm.xlu0 %434, %v409
        %v436 = vpop.permute.xlu0 %435
        %439 = vset.pattern.permute.xlu0 0
        %440 = vperm.xlu0 %439, %v410
        %v441 = vpop.permute.xlu0 %440
        %v443 = vperm.slane %v221, 1
        %v444 = vperm.slane %v222, 1
        %v445 = vmul.f32 %v426, %v443
        %v446 = vmul.f32 %v426, %v444
        %v447 = vmul.f32 %v431, %v443
        %v448 = vmul.f32 %v431, %v444
        %v449 = vmul.f32 %v436, %v443
        %v450 = vmul.f32 %v436, %v444
        %v451 = vmul.f32 %v441, %v443
        %v452 = vmul.f32 %v441, %v444
        %453 = vset.pattern.permute.xlu0 1
        %454 = vperm.xlu0 %453, %v407
        %v455 = vpop.permute.xlu0 %454
        %457 = vset.pattern.permute.xlu0 1
        %458 = vperm.xlu0 %457, %v408
        %v459 = vpop.permute.xlu0 %458
        %461 = vset.pattern.permute.xlu0 1
        %462 = vperm.xlu0 %461, %v409
        %v463 = vpop.permute.xlu0 %462
        %465 = vset.pattern.permute.xlu0 1
        %466 = vperm.xlu0 %465, %v410
        %v467 = vpop.permute.xlu0 %466
        %v469 = vperm.slane %v221, 2
        %v470 = vperm.slane %v222, 2
        %v471 = vmul.f32 %v455, %v469
        %v472 = vmul.f32 %v455, %v470
        %v473 = vmul.f32 %v459, %v469
        %v474 = vmul.f32 %v459, %v470
        %v475 = vmul.f32 %v463, %v469
        %v476 = vmul.f32 %v463, %v470
        %v477 = vmul.f32 %v467, %v469
        %v478 = vmul.f32 %v467, %v470
        %v479 = vadd.f32 %v445, %v471
        %v480 = vadd.f32 %v446, %v472
        %v481 = vadd.f32 %v447, %v473
        %v482 = vadd.f32 %v448, %v474
        %v483 = vadd.f32 %v449, %v475
        %v484 = vadd.f32 %v450, %v476
        %v485 = vadd.f32 %v451, %v477
        %v486 = vadd.f32 %v452, %v478
        %488 = vset.pattern.permute.xlu0 0
        %489 = vperm.xlu0 %488, %v415
        %v490 = vpop.permute.xlu0 %489
        %493 = vset.pattern.permute.xlu0 0
        %494 = vperm.xlu0 %493, %v416
        %v495 = vpop.permute.xlu0 %494
        %498 = vset.pattern.permute.xlu0 0
        %499 = vperm.xlu0 %498, %v417
        %v500 = vpop.permute.xlu0 %499
        %503 = vset.pattern.permute.xlu0 0
        %504 = vperm.xlu0 %503, %v418
        %v505 = vpop.permute.xlu0 %504
        %v507 = vadd.f32 %v479, %v490
        %v508 = vadd.f32 %v480, %v490
        %v509 = vadd.f32 %v481, %v495
        %v510 = vadd.f32 %v482, %v495
        %v511 = vadd.f32 %v483, %v500
        %v512 = vadd.f32 %v484, %v500
        %v513 = vadd.f32 %v485, %v505
        %v514 = vadd.f32 %v486, %v505
        %v515 = vmax.f32 %v507, 0.0
        %v516 = vmax.f32 %v508, 0.0
        %v517 = vmax.f32 %v509, 0.0
        %v518 = vmax.f32 %v510, 0.0
        %v519 = vmax.f32 %v511, 0.0
        %v520 = vmax.f32 %v512, 0.0
        %v521 = vmax.f32 %v513, 0.0
        %v522 = vmax.f32 %v514, 0.0
        %524 = vset.pattern.permute.xlu0 0
        %525 = vperm.xlu0 %524, %v419
        %v526 = vpop.permute.xlu0 %525
        %529 = vset.pattern.permute.xlu0 0
        %530 = vperm.xlu0 %529, %v420
        %v531 = vpop.permute.xlu0 %530
        %534 = vset.pattern.permute.xlu0 0
        %535 = vperm.xlu0 %534, %v421
        %v536 = vpop.permute.xlu0 %535
        %539 = vset.pattern.permute.xlu0 0
        %540 = vperm.xlu0 %539, %v422
        %v541 = vpop.permute.xlu0 %540
        %v544 = vsel %vm336, %v411, 0
        %v547 = vsel %vm336, %v412, 0
        %v550 = vsel %vm336, %v413, 0
        %v553 = vsel %vm336, %v414, 0
        %555 = vmatpush.msra.mxu0 0.0
        %556 = vmatpush.msra.mxu0 0.0
        %557 = vmatpush.msra.mxu0 0.0
        %558 = vmatpush.msra.mxu0 0.0
        %559 = vmatpush.msra.mxu0 0.0
        %560 = vmatpush.msra.mxu0 0.0
        %561 = vmatpush.msra.mxu0 0.0
        %562 = vmatpush.msra.mxu0 0.0
        %563 = vmatpush.msra.mxu0 0.0
        %564 = vmatpush.msra.mxu0 0.0
        %565 = vmatpush.msra.mxu0 0.0
        %566 = vmatpush.msra.mxu0 0.0
        %567 = vmatpush.msra.mxu0 %v521
        %568 = vmatpush.msra.mxu0 %v519
        %569 = vmatpush.msra.mxu0 %v517
        %570 = vmatpush.msra.mxu0 %v515
        %571 = vmatmul.f32.gmra.mxu0 %v544
        %v572 = vpop.f32.mrf.mxu0
        %v573 = vadd.f32 %v526, %v572
        %574 = vmatmul.f32.gmra.mxu0 %v547
        %v575 = vpop.f32.mrf.mxu0
        %v576 = vadd.f32 %v531, %v575
        %577 = vmatmul.f32.gmra.mxu0 %v550
        %v578 = vpop.f32.mrf.mxu0
        %v579 = vadd.f32 %v536, %v578
        %580 = vmatmul.f32.gmra.mxu0 %v553
        %v581 = vpop.f32.mrf.mxu0
        %v582 = vadd.f32 %v541, %v581
        %583 = vdwg.mxu0
        %584 = vmatpush.msra.mxu0 0.0
        %585 = vmatpush.msra.mxu0 0.0
        %586 = vmatpush.msra.mxu0 0.0
        %587 = vmatpush.msra.mxu0 0.0
        %588 = vmatpush.msra.mxu0 0.0
        %589 = vmatpush.msra.mxu0 0.0
        %590 = vmatpush.msra.mxu0 0.0
        %591 = vmatpush.msra.mxu0 0.0
        %592 = vmatpush.msra.mxu0 0.0
        %593 = vmatpush.msra.mxu0 0.0
        %594 = vmatpush.msra.mxu0 0.0
        %595 = vmatpush.msra.mxu0 0.0
        %596 = vmatpush.msra.mxu0 %v522
        %597 = vmatpush.msra.mxu0 %v520
        %598 = vmatpush.msra.mxu0 %v518
        %599 = vmatpush.msra.mxu0 %v516
        %600 = vmatmul.f32.gmra.mxu0 %v544
        %v601 = vpop.f32.mrf.mxu0
        %v602 = vadd.f32 %v526, %v601
        %603 = vmatmul.f32.gmra.mxu0 %v547
        %v604 = vpop.f32.mrf.mxu0
        %v605 = vadd.f32 %v531, %v604
        %606 = vmatmul.f32.gmra.mxu0 %v550
        %v607 = vpop.f32.mrf.mxu0
        %v608 = vadd.f32 %v536, %v607
        %609 = vmatmul.f32.gmra.mxu0 %v553
        %v610 = vpop.f32.mrf.mxu0
        %v611 = vadd.f32 %v541, %v610
        %612 = vdwg.mxu0
        %v613 = vld [vmem:[%s212] sm:$0xff]
        %v614 = vld [vmem:[%s212 + $0x8] sm:$0xff]
        %v615 = vld [vmem:[%s2 + $0x80] sm:$0xff]
        %v616 = vld [vmem:[%s2 + $0x88] sm:$0xff]
        %v617 = vld [vmem:[%s2 + $0x90] sm:$0xff]
        %v618 = vld [vmem:[%s2 + $0x98] sm:$0xff]
        %v619 = vld [vmem:[%s2 + $0xa0] sm:$0xff]
        %v620 = vld [vmem:[%s2 + $0xa8] sm:$0xff]
        %v621 = vld [vmem:[%s2 + $0xb0] sm:$0xff]
        %v622 = vld [vmem:[%s3 + $0x80] sm:$0xff]
        %v623 = vld [vmem:[%s3 + $0x88] sm:$0xff]
        %v624 = vld [vmem:[%s3 + $0x90] sm:$0xff]
        %v625 = vld [vmem:[%s3 + $0x98] sm:$0xff]
        %v626 = vld [vmem:[%s3 + $0xa0] sm:$0xff]
        %v627 = vld [vmem:[%s3 + $0xa8] sm:$0xff]
        %v628 = vld [vmem:[%s3 + $0xb0] sm:$0xff]
        %v629 = vld [vmem:[%s3 + $0xb8] sm:$0xff]
        %v630 = vld [vmem:[%s3 + $0xc0] sm:$0xff]
        %v631 = vld [vmem:[%s3 + $0xc8] sm:$0xff]
        %v632 = vld [vmem:[%s3 + $0xd0] sm:$0xff]
        %634 = vset.pattern.permute.xlu0 0
        %635 = vperm.xlu0 %634, %v622
        %v636 = vpop.permute.xlu0 %635
        %vm638 = vcmask 64512
        %v640 = vsel %vm638, %v615, 0
        %642 = vmatpush.msra.mxu0 0.0
        %643 = vmatpush.msra.mxu0 0.0
        %644 = vmatpush.msra.mxu0 0.0
        %645 = vmatpush.msra.mxu0 0.0
        %646 = vmatpush.msra.mxu0 0.0
        %647 = vmatpush.msra.mxu0 0.0
        %648 = vmatpush.msra.mxu0 0.0
        %649 = vmatpush.msra.mxu0 0.0
        %650 = vmatpush.msra.mxu0 0.0
        %651 = vmatpush.msra.mxu0 0.0
        %652 = vmatpush.msra.mxu0 0.0
        %653 = vmatpush.msra.mxu0 0.0
        %654 = vmatpush.msra.mxu0 0.0
        %655 = vmatpush.msra.mxu0 0.0
        %656 = vmatpush.msra.mxu0 0.0
        %657 = vmatpush.msra.mxu0 %v613
        %658 = vmatmul.f32.gmra.mxu0 %v640
        %v659 = vpop.f32.mrf.mxu0
        %v660 = vadd.f32 %v636, %v659
        %661 = vdwg.mxu0
        %662 = vmatpush.msra.mxu0 0.0
        %663 = vmatpush.msra.mxu0 0.0
        %664 = vmatpush.msra.mxu0 0.0
        %665 = vmatpush.msra.mxu0 0.0
        %666 = vmatpush.msra.mxu0 0.0
        %667 = vmatpush.msra.mxu0 0.0
        %668 = vmatpush.msra.mxu0 0.0
        %669 = vmatpush.msra.mxu0 0.0
        %670 = vmatpush.msra.mxu0 0.0
        %671 = vmatpush.msra.mxu0 0.0
        %672 = vmatpush.msra.mxu0 0.0
        %673 = vmatpush.msra.mxu0 0.0
        %674 = vmatpush.msra.mxu0 0.0
        %675 = vmatpush.msra.mxu0 0.0
        %676 = vmatpush.msra.mxu0 0.0
        %677 = vmatpush.msra.mxu0 %v614
        %678 = vmatmul.f32.gmra.mxu0 %v640
        %v679 = vpop.f32.mrf.mxu0
        %v680 = vadd.f32 %v636, %v679
        %681 = vdwg.mxu0
        %v682 = vmax.f32 %v660, 0.0
        %v683 = vmax.f32 %v680, 0.0
        %685 = vset.pattern.permute.xlu0 0
        %686 = vperm.xlu0 %685, %v623
        %v687 = vpop.permute.xlu0 %686
        %690 = vset.pattern.permute.xlu0 0
        %691 = vperm.xlu0 %690, %v624
        %v692 = vpop.permute.xlu0 %691
        %v695 = vsel %vm638, %v616, 0
        %v698 = vsel %vm638, %v617, 0
        %700 = vmatpush.msra.mxu0 0.0
        %701 = vmatpush.msra.mxu0 0.0
        %702 = vmatpush.msra.mxu0 0.0
        %703 = vmatpush.msra.mxu0 0.0
        %704 = vmatpush.msra.mxu0 0.0
        %705 = vmatpush.msra.mxu0 0.0
        %706 = vmatpush.msra.mxu0 0.0
        %707 = vmatpush.msra.mxu0 0.0
        %708 = vmatpush.msra.mxu0 0.0
        %709 = vmatpush.msra.mxu0 0.0
        %710 = vmatpush.msra.mxu0 0.0
        %711 = vmatpush.msra.mxu0 0.0
        %712 = vmatpush.msra.mxu0 0.0
        %713 = vmatpush.msra.mxu0 0.0
        %714 = vmatpush.msra.mxu0 0.0
        %715 = vmatpush.msra.mxu0 %v682
        %716 = vmatmul.f32.gmra.mxu0 %v695
        %v717 = vpop.f32.mrf.mxu0
        %v718 = vadd.f32 %v687, %v717
        %719 = vmatmul.f32.gmra.mxu0 %v698
        %v720 = vpop.f32.mrf.mxu0
        %v721 = vadd.f32 %v692, %v720
        %722 = vdwg.mxu0
        %723 = vmatpush.msra.mxu0 0.0
        %724 = vmatpush.msra.mxu0 0.0
        %725 = vmatpush.msra.mxu0 0.0
        %726 = vmatpush.msra.mxu0 0.0
        %727 = vmatpush.msra.mxu0 0.0
        %728 = vmatpush.msra.mxu0 0.0
        %729 = vmatpush.msra.mxu0 0.0
        %730 = vmatpush.msra.mxu0 0.0
        %731 = vmatpush.msra.mxu0 0.0
        %732 = vmatpush.msra.mxu0 0.0
        %733 = vmatpush.msra.mxu0 0.0
        %734 = vmatpush.msra.mxu0 0.0
        %735 = vmatpush.msra.mxu0 0.0
        %736 = vmatpush.msra.mxu0 0.0
        %737 = vmatpush.msra.mxu0 0.0
        %738 = vmatpush.msra.mxu0 %v683
        %739 = vmatmul.f32.gmra.mxu0 %v695
        %v740 = vpop.f32.mrf.mxu0
        %v741 = vadd.f32 %v687, %v740
        %742 = vmatmul.f32.gmra.mxu0 %v698
        %v743 = vpop.f32.mrf.mxu0
        %v744 = vadd.f32 %v692, %v743
        %745 = vdwg.mxu0
        %v746 = vmax.f32 %v718, 0.0
        %v747 = vmax.f32 %v741, 0.0
        %v748 = vmax.f32 %v721, 0.0
        %v749 = vmax.f32 %v744, 0.0
        %751 = vset.pattern.permute.xlu0 0
        %752 = vperm.xlu0 %751, %v625
        %v753 = vpop.permute.xlu0 %752
        %756 = vset.pattern.permute.xlu0 0
        %757 = vperm.xlu0 %756, %v626
        %v758 = vpop.permute.xlu0 %757
        %vm760 = vcmask 130048
        %v762 = vsel %vm760, %v618, 0
        %v765 = vsel %vm760, %v619, 0
        %767 = vmatpush.msra.mxu0 0.0
        %768 = vmatpush.msra.mxu0 0.0
        %769 = vmatpush.msra.mxu0 0.0
        %770 = vmatpush.msra.mxu0 0.0
        %771 = vmatpush.msra.mxu0 0.0
        %772 = vmatpush.msra.mxu0 0.0
        %773 = vmatpush.msra.mxu0 0.0
        %774 = vmatpush.msra.mxu0 0.0
        %775 = vmatpush.msra.mxu0 0.0
        %776 = vmatpush.msra.mxu0 0.0
        %777 = vmatpush.msra.mxu0 0.0
        %778 = vmatpush.msra.mxu0 0.0
        %779 = vmatpush.msra.mxu0 0.0
        %780 = vmatpush.msra.mxu0 0.0
        %781 = vmatpush.msra.mxu0 %v748
        %782 = vmatpush.msra.mxu0 %v746
        %783 = vmatmul.f32.gmra.mxu0 %v762
        %v784 = vpop.f32.mrf.mxu0
        %v785 = vadd.f32 %v753, %v784
        %786 = vmatmul.f32.gmra.mxu0 %v765
        %v787 = vpop.f32.mrf.mxu0
        %v788 = vadd.f32 %v758, %v787
        %789 = vdwg.mxu0
        %790 = vmatpush.msra.mxu0 0.0
        %791 = vmatpush.msra.mxu0 0.0
        %792 = vmatpush.msra.mxu0 0.0
        %793 = vmatpush.msra.mxu0 0.0
        %794 = vmatpush.msra.mxu0 0.0
        %795 = vmatpush.msra.mxu0 0.0
        %796 = vmatpush.msra.mxu0 0.0
        %797 = vmatpush.msra.mxu0 0.0
        %798 = vmatpush.msra.mxu0 0.0
        %799 = vmatpush.msra.mxu0 0.0
        %800 = vmatpush.msra.mxu0 0.0
        %801 = vmatpush.msra.mxu0 0.0
        %802 = vmatpush.msra.mxu0 0.0
        %803 = vmatpush.msra.mxu0 0.0
        %804 = vmatpush.msra.mxu0 %v749
        %805 = vmatpush.msra.mxu0 %v747
        %806 = vmatmul.f32.gmra.mxu0 %v762
        %v807 = vpop.f32.mrf.mxu0
        %v808 = vadd.f32 %v753, %v807
        %809 = vmatmul.f32.gmra.mxu0 %v765
        %v810 = vpop.f32.mrf.mxu0
        %v811 = vadd.f32 %v758, %v810
        %812 = vdwg.mxu0
        %v814 = vsel %vm638, %v620, 0
        %v817 = vsel %vm638, %v621, 0
        %819 = vmatpush.msra.mxu0 0.0
        %820 = vmatpush.msra.mxu0 0.0
        %821 = vmatpush.msra.mxu0 0.0
        %822 = vmatpush.msra.mxu0 0.0
        %823 = vmatpush.msra.mxu0 0.0
        %824 = vmatpush.msra.mxu0 0.0
        %825 = vmatpush.msra.mxu0 0.0
        %826 = vmatpush.msra.mxu0 0.0
        %827 = vmatpush.msra.mxu0 0.0
        %828 = vmatpush.msra.mxu0 0.0
        %829 = vmatpush.msra.mxu0 0.0
        %830 = vmatpush.msra.mxu0 0.0
        %831 = vmatpush.msra.mxu0 0.0
        %832 = vmatpush.msra.mxu0 0.0
        %833 = vmatpush.msra.mxu0 0.0
        %834 = vmatpush.msra.mxu0 %v613
        %835 = vmatmul.f32.gmra.mxu0 %v814
        %v836 = vpop.f32.mrf.mxu0
        %v837 = vadd.f32 0.0, %v836
        %838 = vmatmul.f32.gmra.mxu0 %v817
        %v839 = vpop.f32.mrf.mxu0
        %v840 = vadd.f32 0.0, %v839
        %841 = vdwg.mxu0
        %842 = vmatpush.msra.mxu0 0.0
        %843 = vmatpush.msra.mxu0 0.0
        %844 = vmatpush.msra.mxu0 0.0
        %845 = vmatpush.msra.mxu0 0.0
        %846 = vmatpush.msra.mxu0 0.0
        %847 = vmatpush.msra.mxu0 0.0
        %848 = vmatpush.msra.mxu0 0.0
        %849 = vmatpush.msra.mxu0 0.0
        %850 = vmatpush.msra.mxu0 0.0
        %851 = vmatpush.msra.mxu0 0.0
        %852 = vmatpush.msra.mxu0 0.0
        %853 = vmatpush.msra.mxu0 0.0
        %854 = vmatpush.msra.mxu0 0.0
        %855 = vmatpush.msra.mxu0 0.0
        %856 = vmatpush.msra.mxu0 0.0
        %857 = vmatpush.msra.mxu0 %v614
        %858 = vmatmul.f32.gmra.mxu0 %v814
        %v859 = vpop.f32.mrf.mxu0
        %v860 = vadd.f32 0.0, %v859
        %861 = vmatmul.f32.gmra.mxu0 %v817
        %v862 = vpop.f32.mrf.mxu0
        %v863 = vadd.f32 0.0, %v862
        %864 = vdwg.mxu0
        %v865 = vadd.f32 %v785, %v837
        %v866 = vadd.f32 %v808, %v860
        %v867 = vadd.f32 %v788, %v840
        %v868 = vadd.f32 %v811, %v863
        %870 = vset.pattern.permute.xlu0 0
        %871 = vperm.xlu0 %870, %v627
        %v872 = vpop.permute.xlu0 %871
        %875 = vset.pattern.permute.xlu0 0
        %876 = vperm.xlu0 %875, %v628
        %v877 = vpop.permute.xlu0 %876
        %v879 = vadd.f32 %v865, %v872
        %v880 = vadd.f32 %v866, %v872
        %v881 = vadd.f32 %v867, %v877
        %v882 = vadd.f32 %v868, %v877
        %v883 = vadd.f32 %v879, %v881
        %v884 = vrot.slane %v883, 4
        %v885 = vadd.f32 %v883, %v884
        %v886 = vrot.slane %v885, 2
        %v887 = vadd.f32 %v885, %v886
        %v888 = vrot.slane %v887, 1
        %v889 = vadd.f32 %v887, %v888
        %v890 = vadd.f32 %v880, %v882
        %v891 = vrot.slane %v890, 4
        %v892 = vadd.f32 %v890, %v891
        %v893 = vrot.slane %v892, 2
        %v894 = vadd.f32 %v892, %v893
        %v895 = vrot.slane %v894, 1
        %v896 = vadd.f32 %v894, %v895
        %v897 = vrcp.pop 16.0
        %v898 = vmul.f32 16.0, %v897
        %v899 = vsub.f32 1.0, %v898
        %v900 = vmul.f32 %v897, %v899
        %v901 = vadd.f32 %v897, %v900
        %vm902 = vweird.f32 %v897
        %v903 = vsel %vm902, %v897, %v901
        %v904 = vmul.f32 %v889, %v903
        %v905 = vmul.f32 %v896, %v903
        %v906 = vsub.f32 %v879, %v904
        %v907 = vsub.f32 %v880, %v905
        %v908 = vsub.f32 %v881, %v904
        %v909 = vsub.f32 %v882, %v905
        %v910 = vmul.f32 %v906, %v906
        %v911 = vmul.f32 %v907, %v907
        %v912 = vmul.f32 %v908, %v908
        %v913 = vmul.f32 %v909, %v909
        %v914 = vadd.f32 %v910, %v912
        %v915 = vrot.slane %v914, 4
        %v916 = vadd.f32 %v914, %v915
        %v917 = vrot.slane %v916, 2
        %v918 = vadd.f32 %v916, %v917
        %v919 = vrot.slane %v918, 1
        %v920 = vadd.f32 %v918, %v919
        %v921 = vadd.f32 %v911, %v913
        %v922 = vrot.slane %v921, 4
        %v923 = vadd.f32 %v921, %v922
        %v924 = vrot.slane %v923, 2
        %v925 = vadd.f32 %v923, %v924
        %v926 = vrot.slane %v925, 1
        %v927 = vadd.f32 %v925, %v926
        %v928 = vmul.f32 %v920, %v903
        %v929 = vmul.f32 %v927, %v903
        %v930 = vadd.f32 %v928, 1e-05
        %v931 = vadd.f32 %v929, 1e-05
        %v932 = vrsqrt.pop %v930
        %v933 = vmul.f32 %v932, %v930
        %v934 = vmul.f32 %v933, %v932
        %v935 = vmul.f32 0.5, %v934
        %v936 = vsub.f32 1.5, %v935
        %v937 = vmul.f32 %v932, %v936
        %vm938 = vweird.f32 %v930
        %vm939 = vweird.f32 %v932
        %vm940 = vmor %vm938, %vm939
        %v941 = vsel %vm940, %v932, %v937
        %v942 = vrsqrt.pop %v931
        %v943 = vmul.f32 %v942, %v931
        %v944 = vmul.f32 %v943, %v942
        %v945 = vmul.f32 0.5, %v944
        %v946 = vsub.f32 1.5, %v945
        %v947 = vmul.f32 %v942, %v946
        %vm948 = vweird.f32 %v931
        %vm949 = vweird.f32 %v942
        %vm950 = vmor %vm948, %vm949
        %v951 = vsel %vm950, %v942, %v947
        %v952 = vmul.f32 %v906, %v941
        %v953 = vmul.f32 %v907, %v951
        %v954 = vmul.f32 %v908, %v941
        %v955 = vmul.f32 %v909, %v951
        %957 = vset.pattern.permute.xlu0 0
        %958 = vperm.xlu0 %957, %v629
        %v959 = vpop.permute.xlu0 %958
        %962 = vset.pattern.permute.xlu0 0
        %963 = vperm.xlu0 %962, %v630
        %v964 = vpop.permute.xlu0 %963
        %v966 = vmul.f32 %v952, %v959
        %v967 = vmul.f32 %v953, %v959
        %v968 = vmul.f32 %v954, %v964
        %v969 = vmul.f32 %v955, %v964
        %971 = vset.pattern.permute.xlu0 0
        %972 = vperm.xlu0 %971, %v631
        %v973 = vpop.permute.xlu0 %972
        %976 = vset.pattern.permute.xlu0 0
        %977 = vperm.xlu0 %976, %v632
        %v978 = vpop.permute.xlu0 %977
        %v980 = vadd.f32 %v966, %v973
        %v981 = vadd.f32 %v967, %v973
        %v982 = vadd.f32 %v968, %v978
        %v983 = vadd.f32 %v969, %v978
        %v984 = vld [vmem:[%s2 + $0xb8] sm:$0xff]
        %v985 = vld [vmem:[%s2 + $0xc0] sm:$0xff]
        %v986 = vld [vmem:[%s2 + $0xc8] sm:$0xff]
        %v987 = vld [vmem:[%s2 + $0xd0] sm:$0xff]
        %v988 = vld [vmem:[%s2 + $0xd8] sm:$0xff]
        %v989 = vld [vmem:[%s2 + $0xe0] sm:$0xff]
        %v990 = vld [vmem:[%s2 + $0xe8] sm:$0xff]
        %v991 = vld [vmem:[%s2 + $0xf0] sm:$0xff]
        %v992 = vld [vmem:[%s2 + $0xf8] sm:$0xff]
        %v993 = vld [vmem:[%s2 + $0x100] sm:$0xff]
        %v994 = vld [vmem:[%s2 + $0x108] sm:$0xff]
        %v995 = vld [vmem:[%s2 + $0x110] sm:$0xff]
        %v996 = vld [vmem:[%s2 + $0x118] sm:$0xff]
        %v997 = vld [vmem:[%s2 + $0x120] sm:$0xff]
        %v998 = vld [vmem:[%s3 + $0xd8] sm:$0xff]
        %v999 = vld [vmem:[%s3 + $0xe0] sm:$0xff]
        %v1000 = vld [vmem:[%s3 + $0xe8] sm:$0xff]
        %v1001 = vld [vmem:[%s3 + $0xf0] sm:$0xff]
        %v1002 = vld [vmem:[%s3 + $0xf8] sm:$0xff]
        %v1003 = vld [vmem:[%s3 + $0x100] sm:$0xff]
        %v1004 = vld [vmem:[%s3 + $0x108] sm:$0xff]
        %v1005 = vld [vmem:[%s3 + $0x110] sm:$0xff]
        %v1006 = vld [vmem:[%s3 + $0x118] sm:$0xff]
        %v1007 = vld [vmem:[%s3 + $0x120] sm:$0xff]
        %v1008 = vld [vmem:[%s3 + $0x128] sm:$0xff]
        %v1009 = vld [vmem:[%s3 + $0x130] sm:$0xff]
        %v1010 = vld [vmem:[%s3 + $0x138] sm:$0xff]
        %v1011 = vld [vmem:[%s3 + $0x140] sm:$0xff]
        %v1012 = vld [vmem:[%s3 + $0x148] sm:$0xff]
        %v1013 = vld [vmem:[%s3 + $0x150] sm:$0xff]
        %v1014 = vld [vmem:[%s3 + $0x158] sm:$0xff]
        %v1015 = vld [vmem:[%s3 + $0x160] sm:$0xff]
        %v1016 = vld [vmem:[%s3 + $0x168] sm:$0xff]
        %v1017 = vld [vmem:[%s3 + $0x170] sm:$0xff]
        %v1018 = vld [vmem:[%s3 + $0x178] sm:$0xff]
        %v1019 = vld [vmem:[%s3 + $0x180] sm:$0xff]
        %1021 = vset.pattern.permute.xlu0 0
        %1022 = vperm.xlu0 %1021, %v998
        %v1023 = vpop.permute.xlu0 %1022
        %1026 = vset.pattern.permute.xlu0 0
        %1027 = vperm.xlu0 %1026, %v999
        %v1028 = vpop.permute.xlu0 %1027
        %v1031 = vsel %vm760, %v984, 0
        %v1034 = vsel %vm760, %v985, 0
        %1036 = vmatpush.msra.mxu0 0.0
        %1037 = vmatpush.msra.mxu0 0.0
        %1038 = vmatpush.msra.mxu0 0.0
        %1039 = vmatpush.msra.mxu0 0.0
        %1040 = vmatpush.msra.mxu0 0.0
        %1041 = vmatpush.msra.mxu0 0.0
        %1042 = vmatpush.msra.mxu0 0.0
        %1043 = vmatpush.msra.mxu0 0.0
        %1044 = vmatpush.msra.mxu0 0.0
        %1045 = vmatpush.msra.mxu0 0.0
        %1046 = vmatpush.msra.mxu0 0.0
        %1047 = vmatpush.msra.mxu0 0.0
        %1048 = vmatpush.msra.mxu0 0.0
        %1049 = vmatpush.msra.mxu0 0.0
        %1050 = vmatpush.msra.mxu0 %v982
        %1051 = vmatpush.msra.mxu0 %v980
        %1052 = vmatmul.f32.gmra.mxu0 %v1031
        %v1053 = vpop.f32.mrf.mxu0
        %v1054 = vadd.f32 %v1023, %v1053
        %1055 = vmatmul.f32.gmra.mxu0 %v1034
        %v1056 = vpop.f32.mrf.mxu0
        %v1057 = vadd.f32 %v1028, %v1056
        %1058 = vdwg.mxu0
        %1059 = vmatpush.msra.mxu0 0.0
        %1060 = vmatpush.msra.mxu0 0.0
        %1061 = vmatpush.msra.mxu0 0.0
        %1062 = vmatpush.msra.mxu0 0.0
        %1063 = vmatpush.msra.mxu0 0.0
        %1064 = vmatpush.msra.mxu0 0.0
        %1065 = vmatpush.msra.mxu0 0.0
        %1066 = vmatpush.msra.mxu0 0.0
        %1067 = vmatpush.msra.mxu0 0.0
        %1068 = vmatpush.msra.mxu0 0.0
        %1069 = vmatpush.msra.mxu0 0.0
        %1070 = vmatpush.msra.mxu0 0.0
        %1071 = vmatpush.msra.mxu0 0.0
        %1072 = vmatpush.msra.mxu0 0.0
        %1073 = vmatpush.msra.mxu0 %v983
        %1074 = vmatpush.msra.mxu0 %v981
        %1075 = vmatmul.f32.gmra.mxu0 %v1031
        %v1076 = vpop.f32.mrf.mxu0
        %v1077 = vadd.f32 %v1023, %v1076
        %1078 = vmatmul.f32.gmra.mxu0 %v1034
        %v1079 = vpop.f32.mrf.mxu0
        %v1080 = vadd.f32 %v1028, %v1079
        %1081 = vdwg.mxu0
        %v1082 = vmax.f32 %v1054, 0.0
        %v1083 = vmax.f32 %v1077, 0.0
        %v1084 = vmax.f32 %v1057, 0.0
        %v1085 = vmax.f32 %v1080, 0.0
        %1087 = vset.pattern.permute.xlu0 0
        %1088 = vperm.xlu0 %1087, %v1000
        %v1089 = vpop.permute.xlu0 %1088
        %1092 = vset.pattern.permute.xlu0 0
        %1093 = vperm.xlu0 %1092, %v1001
        %v1094 = vpop.permute.xlu0 %1093
        %1097 = vset.pattern.permute.xlu0 0
        %1098 = vperm.xlu0 %1097, %v1002
        %v1099 = vpop.permute.xlu0 %1098
        %1102 = vset.pattern.permute.xlu0 0
        %1103 = vperm.xlu0 %1102, %v1003
        %v1104 = vpop.permute.xlu0 %1103
        %v1107 = vsel %vm760, %v986, 0
        %v1110 = vsel %vm760, %v987, 0
        %v1113 = vsel %vm760, %v988, 0
        %v1116 = vsel %vm760, %v989, 0
        %1118 = vmatpush.msra.mxu0 0.0
        %1119 = vmatpush.msra.mxu0 0.0
        %1120 = vmatpush.msra.mxu0 0.0
        %1121 = vmatpush.msra.mxu0 0.0
        %1122 = vmatpush.msra.mxu0 0.0
        %1123 = vmatpush.msra.mxu0 0.0
        %1124 = vmatpush.msra.mxu0 0.0
        %1125 = vmatpush.msra.mxu0 0.0
        %1126 = vmatpush.msra.mxu0 0.0
        %1127 = vmatpush.msra.mxu0 0.0
        %1128 = vmatpush.msra.mxu0 0.0
        %1129 = vmatpush.msra.mxu0 0.0
        %1130 = vmatpush.msra.mxu0 0.0
        %1131 = vmatpush.msra.mxu0 0.0
        %1132 = vmatpush.msra.mxu0 %v1084
        %1133 = vmatpush.msra.mxu0 %v1082
        %1134 = vmatmul.f32.gmra.mxu0 %v1107
        %v1135 = vpop.f32.mrf.mxu0
        %v1136 = vadd.f32 %v1089, %v1135
        %1137 = vmatmul.f32.gmra.mxu0 %v1110
        %v1138 = vpop.f32.mrf.mxu0
        %v1139 = vadd.f32 %v1094, %v1138
        %1140 = vmatmul.f32.gmra.mxu0 %v1113
        %v1141 = vpop.f32.mrf.mxu0
        %v1142 = vadd.f32 %v1099, %v1141
        %1143 = vmatmul.f32.gmra.mxu0 %v1116
        %v1144 = vpop.f32.mrf.mxu0
        %v1145 = vadd.f32 %v1104, %v1144
        %1146 = vdwg.mxu0
        %1147 = vmatpush.msra.mxu0 0.0
        %1148 = vmatpush.msra.mxu0 0.0
        %1149 = vmatpush.msra.mxu0 0.0
        %1150 = vmatpush.msra.mxu0 0.0
        %1151 = vmatpush.msra.mxu0 0.0
        %1152 = vmatpush.msra.mxu0 0.0
        %1153 = vmatpush.msra.mxu0 0.0
        %1154 = vmatpush.msra.mxu0 0.0
        %1155 = vmatpush.msra.mxu0 0.0
        %1156 = vmatpush.msra.mxu0 0.0
        %1157 = vmatpush.msra.mxu0 0.0
        %1158 = vmatpush.msra.mxu0 0.0
        %1159 = vmatpush.msra.mxu0 0.0
        %1160 = vmatpush.msra.mxu0 0.0
        %1161 = vmatpush.msra.mxu0 %v1085
        %1162 = vmatpush.msra.mxu0 %v1083
        %1163 = vmatmul.f32.gmra.mxu0 %v1107
        %v1164 = vpop.f32.mrf.mxu0
        %v1165 = vadd.f32 %v1089, %v1164
        %1166 = vmatmul.f32.gmra.mxu0 %v1110
        %v1167 = vpop.f32.mrf.mxu0
        %v1168 = vadd.f32 %v1094, %v1167
        %1169 = vmatmul.f32.gmra.mxu0 %v1113
        %v1170 = vpop.f32.mrf.mxu0
        %v1171 = vadd.f32 %v1099, %v1170
        %1172 = vmatmul.f32.gmra.mxu0 %v1116
        %v1173 = vpop.f32.mrf.mxu0
        %v1174 = vadd.f32 %v1104, %v1173
        %1175 = vdwg.mxu0
        %v1176 = vmax.f32 %v1136, 0.0
        %v1177 = vmax.f32 %v1165, 0.0
        %v1178 = vmax.f32 %v1139, 0.0
        %v1179 = vmax.f32 %v1168, 0.0
        %v1180 = vmax.f32 %v1142, 0.0
        %v1181 = vmax.f32 %v1171, 0.0
        %v1182 = vmax.f32 %v1145, 0.0
        %v1183 = vmax.f32 %v1174, 0.0
        %1185 = vset.pattern.permute.xlu0 0
        %1186 = vperm.xlu0 %1185, %v1004
        %v1187 = vpop.permute.xlu0 %1186
        %1190 = vset.pattern.permute.xlu0 0
        %1191 = vperm.xlu0 %1190, %v1005
        %v1192 = vpop.permute.xlu0 %1191
        %1195 = vset.pattern.permute.xlu0 0
        %1196 = vperm.xlu0 %1195, %v1006
        %v1197 = vpop.permute.xlu0 %1196
        %1200 = vset.pattern.permute.xlu0 0
        %1201 = vperm.xlu0 %1200, %v1007
        %v1202 = vpop.permute.xlu0 %1201
        %v1205 = vsel %vm336, %v990, 0
        %v1208 = vsel %vm336, %v991, 0
        %v1211 = vsel %vm336, %v992, 0
        %v1214 = vsel %vm336, %v993, 0
        %1216 = vmatpush.msra.mxu0 0.0
        %1217 = vmatpush.msra.mxu0 0.0
        %1218 = vmatpush.msra.mxu0 0.0
        %1219 = vmatpush.msra.mxu0 0.0
        %1220 = vmatpush.msra.mxu0 0.0
        %1221 = vmatpush.msra.mxu0 0.0
        %1222 = vmatpush.msra.mxu0 0.0
        %1223 = vmatpush.msra.mxu0 0.0
        %1224 = vmatpush.msra.mxu0 0.0
        %1225 = vmatpush.msra.mxu0 0.0
        %1226 = vmatpush.msra.mxu0 0.0
        %1227 = vmatpush.msra.mxu0 0.0
        %1228 = vmatpush.msra.mxu0 %v1182
        %1229 = vmatpush.msra.mxu0 %v1180
        %1230 = vmatpush.msra.mxu0 %v1178
        %1231 = vmatpush.msra.mxu0 %v1176
        %1232 = vmatmul.f32.gmra.mxu0 %v1205
        %v1233 = vpop.f32.mrf.mxu0
        %v1234 = vadd.f32 %v1187, %v1233
        %1235 = vmatmul.f32.gmra.mxu0 %v1208
        %v1236 = vpop.f32.mrf.mxu0
        %v1237 = vadd.f32 %v1192, %v1236
        %1238 = vmatmul.f32.gmra.mxu0 %v1211
        %v1239 = vpop.f32.mrf.mxu0
        %v1240 = vadd.f32 %v1197, %v1239
        %1241 = vmatmul.f32.gmra.mxu0 %v1214
        %v1242 = vpop.f32.mrf.mxu0
        %v1243 = vadd.f32 %v1202, %v1242
        %1244 = vdwg.mxu0
        %1245 = vmatpush.msra.mxu0 0.0
        %1246 = vmatpush.msra.mxu0 0.0
        %1247 = vmatpush.msra.mxu0 0.0
        %1248 = vmatpush.msra.mxu0 0.0
        %1249 = vmatpush.msra.mxu0 0.0
        %1250 = vmatpush.msra.mxu0 0.0
        %1251 = vmatpush.msra.mxu0 0.0
        %1252 = vmatpush.msra.mxu0 0.0
        %1253 = vmatpush.msra.mxu0 0.0
        %1254 = vmatpush.msra.mxu0 0.0
        %1255 = vmatpush.msra.mxu0 0.0
        %1256 = vmatpush.msra.mxu0 0.0
        %1257 = vmatpush.msra.mxu0 %v1183
        %1258 = vmatpush.msra.mxu0 %v1181
        %1259 = vmatpush.msra.mxu0 %v1179
        %1260 = vmatpush.msra.mxu0 %v1177
        %1261 = vmatmul.f32.gmra.mxu0 %v1205
        %v1262 = vpop.f32.mrf.mxu0
        %v1263 = vadd.f32 %v1187, %v1262
        %1264 = vmatmul.f32.gmra.mxu0 %v1208
        %v1265 = vpop.f32.mrf.mxu0
        %v1266 = vadd.f32 %v1192, %v1265
        %1267 = vmatmul.f32.gmra.mxu0 %v1211
        %v1268 = vpop.f32.mrf.mxu0
        %v1269 = vadd.f32 %v1197, %v1268
        %1270 = vmatmul.f32.gmra.mxu0 %v1214
        %v1271 = vpop.f32.mrf.mxu0
        %v1272 = vadd.f32 %v1202, %v1271
        %1273 = vdwg.mxu0
        %v1275 = vsel %vm760, %v994, 0
        %v1278 = vsel %vm760, %v995, 0
        %v1281 = vsel %vm760, %v996, 0
        %v1284 = vsel %vm760, %v997, 0
        %1286 = vmatpush.msra.mxu0 0.0
        %1287 = vmatpush.msra.mxu0 0.0
        %1288 = vmatpush.msra.mxu0 0.0
        %1289 = vmatpush.msra.mxu0 0.0
        %1290 = vmatpush.msra.mxu0 0.0
        %1291 = vmatpush.msra.mxu0 0.0
        %1292 = vmatpush.msra.mxu0 0.0
        %1293 = vmatpush.msra.mxu0 0.0
        %1294 = vmatpush.msra.mxu0 0.0
        %1295 = vmatpush.msra.mxu0 0.0
        %1296 = vmatpush.msra.mxu0 0.0
        %1297 = vmatpush.msra.mxu0 0.0
        %1298 = vmatpush.msra.mxu0 0.0
        %1299 = vmatpush.msra.mxu0 0.0
        %1300 = vmatpush.msra.mxu0 %v982
        %1301 = vmatpush.msra.mxu0 %v980
        %1302 = vmatmul.f32.gmra.mxu0 %v1275
        %v1303 = vpop.f32.mrf.mxu0
        %v1304 = vadd.f32 0.0, %v1303
        %1305 = vmatmul.f32.gmra.mxu0 %v1278
        %v1306 = vpop.f32.mrf.mxu0
        %v1307 = vadd.f32 0.0, %v1306
        %1308 = vmatmul.f32.gmra.mxu0 %v1281
        %v1309 = vpop.f32.mrf.mxu0
        %v1310 = vadd.f32 0.0, %v1309
        %1311 = vmatmul.f32.gmra.mxu0 %v1284
        %v1312 = vpop.f32.mrf.mxu0
        %v1313 = vadd.f32 0.0, %v1312
        %1314 = vdwg.mxu0
        %1315 = vmatpush.msra.mxu0 0.0
        %1316 = vmatpush.msra.mxu0 0.0
        %1317 = vmatpush.msra.mxu0 0.0
        %1318 = vmatpush.msra.mxu0 0.0
        %1319 = vmatpush.msra.mxu0 0.0
        %1320 = vmatpush.msra.mxu0 0.0
        %1321 = vmatpush.msra.mxu0 0.0
        %1322 = vmatpush.msra.mxu0 0.0
        %1323 = vmatpush.msra.mxu0 0.0
        %1324 = vmatpush.msra.mxu0 0.0
        %1325 = vmatpush.msra.mxu0 0.0
        %1326 = vmatpush.msra.mxu0 0.0
        %1327 = vmatpush.msra.mxu0 0.0
        %1328 = vmatpush.msra.mxu0 0.0
        %1329 = vmatpush.msra.mxu0 %v983
        %1330 = vmatpush.msra.mxu0 %v981
        %1331 = vmatmul.f32.gmra.mxu0 %v1275
        %v1332 = vpop.f32.mrf.mxu0
        %v1333 = vadd.f32 0.0, %v1332
        %1334 = vmatmul.f32.gmra.mxu0 %v1278
        %v1335 = vpop.f32.mrf.mxu0
        %v1336 = vadd.f32 0.0, %v1335
        %1337 = vmatmul.f32.gmra.mxu0 %v1281
        %v1338 = vpop.f32.mrf.mxu0
        %v1339 = vadd.f32 0.0, %v1338
        %1340 = vmatmul.f32.gmra.mxu0 %v1284
        %v1341 = vpop.f32.mrf.mxu0
        %v1342 = vadd.f32 0.0, %v1341
        %1343 = vdwg.mxu0
        %v1344 = vadd.f32 %v1234, %v1304
        %v1345 = vadd.f32 %v1263, %v1333
        %v1346 = vadd.f32 %v1237, %v1307
        %v1347 = vadd.f32 %v1266, %v1336
        %v1348 = vadd.f32 %v1240, %v1310
        %v1349 = vadd.f32 %v1269, %v1339
        %v1350 = vadd.f32 %v1243, %v1313
        %v1351 = vadd.f32 %v1272, %v1342
        %1353 = vset.pattern.permute.xlu0 0
        %1354 = vperm.xlu0 %1353, %v1008
        %v1355 = vpop.permute.xlu0 %1354
        %1358 = vset.pattern.permute.xlu0 0
        %1359 = vperm.xlu0 %1358, %v1009
        %v1360 = vpop.permute.xlu0 %1359
        %1363 = vset.pattern.permute.xlu0 0
        %1364 = vperm.xlu0 %1363, %v1010
        %v1365 = vpop.permute.xlu0 %1364
        %1368 = vset.pattern.permute.xlu0 0
        %1369 = vperm.xlu0 %1368, %v1011
        %v1370 = vpop.permute.xlu0 %1369
        %v1372 = vadd.f32 %v1344, %v1355
        %v1373 = vadd.f32 %v1345, %v1355
        %v1374 = vadd.f32 %v1346, %v1360
        %v1375 = vadd.f32 %v1347, %v1360
        %v1376 = vadd.f32 %v1348, %v1365
        %v1377 = vadd.f32 %v1349, %v1365
        %v1378 = vadd.f32 %v1350, %v1370
        %v1379 = vadd.f32 %v1351, %v1370
        %v1380 = vadd.f32 %v1372, %v1374
        %v1381 = vadd.f32 %v1380, %v1376
        %v1382 = vadd.f32 %v1381, %v1378
        %v1383 = vrot.slane %v1382, 4
        %v1384 = vadd.f32 %v1382, %v1383
        %v1385 = vrot.slane %v1384, 2
        %v1386 = vadd.f32 %v1384, %v1385
        %v1387 = vrot.slane %v1386, 1
        %v1388 = vadd.f32 %v1386, %v1387
        %v1389 = vadd.f32 %v1373, %v1375
        %v1390 = vadd.f32 %v1389, %v1377
        %v1391 = vadd.f32 %v1390, %v1379
        %v1392 = vrot.slane %v1391, 4
        %v1393 = vadd.f32 %v1391, %v1392
        %v1394 = vrot.slane %v1393, 2
        %v1395 = vadd.f32 %v1393, %v1394
        %v1396 = vrot.slane %v1395, 1
        %v1397 = vadd.f32 %v1395, %v1396
        %v1398 = vrcp.pop 32.0
        %v1399 = vmul.f32 32.0, %v1398
        %v1400 = vsub.f32 1.0, %v1399
        %v1401 = vmul.f32 %v1398, %v1400
        %v1402 = vadd.f32 %v1398, %v1401
        %vm1403 = vweird.f32 %v1398
        %v1404 = vsel %vm1403, %v1398, %v1402
        %v1405 = vmul.f32 %v1388, %v1404
        %v1406 = vmul.f32 %v1397, %v1404
        %v1407 = vsub.f32 %v1372, %v1405
        %v1408 = vsub.f32 %v1373, %v1406
        %v1409 = vsub.f32 %v1374, %v1405
        %v1410 = vsub.f32 %v1375, %v1406
        %v1411 = vsub.f32 %v1376, %v1405
        %v1412 = vsub.f32 %v1377, %v1406
        %v1413 = vsub.f32 %v1378, %v1405
        %v1414 = vsub.f32 %v1379, %v1406
        %v1415 = vmul.f32 %v1407, %v1407
        %v1416 = vmul.f32 %v1408, %v1408
        %v1417 = vmul.f32 %v1409, %v1409
        %v1418 = vmul.f32 %v1410, %v1410
        %v1419 = vmul.f32 %v1411, %v1411
        %v1420 = vmul.f32 %v1412, %v1412
        %v1421 = vmul.f32 %v1413, %v1413
        %v1422 = vmul.f32 %v1414, %v1414
        %v1423 = vadd.f32 %v1415, %v1417
        %v1424 = vadd.f32 %v1423, %v1419
        %v1425 = vadd.f32 %v1424, %v1421
        %v1426 = vrot.slane %v1425, 4
        %v1427 = vadd.f32 %v1425, %v1426
        %v1428 = vrot.slane %v1427, 2
        %v1429 = vadd.f32 %v1427, %v1428
        %v1430 = vrot.slane %v1429, 1
        %v1431 = vadd.f32 %v1429, %v1430
        %v1432 = vadd.f32 %v1416, %v1418
        %v1433 = vadd.f32 %v1432, %v1420
        %v1434 = vadd.f32 %v1433, %v1422
        %v1435 = vrot.slane %v1434, 4
        %v1436 = vadd.f32 %v1434, %v1435
        %v1437 = vrot.slane %v1436, 2
        %v1438 = vadd.f32 %v1436, %v1437
        %v1439 = vrot.slane %v1438, 1
        %v1440 = vadd.f32 %v1438, %v1439
        %v1441 = vmul.f32 %v1431, %v1404
        %v1442 = vmul.f32 %v1440, %v1404
        %v1443 = vadd.f32 %v1441, 1e-05
        %v1444 = vadd.f32 %v1442, 1e-05
        %v1445 = vrsqrt.pop %v1443
        %v1446 = vmul.f32 %v1445, %v1443
        %v1447 = vmul.f32 %v1446, %v1445
        %v1448 = vmul.f32 0.5, %v1447
        %v1449 = vsub.f32 1.5, %v1448
        %v1450 = vmul.f32 %v1445, %v1449
        %vm1451 = vweird.f32 %v1443
        %vm1452 = vweird.f32 %v1445
        %vm1453 = vmor %vm1451, %vm1452
        %v1454 = vsel %vm1453, %v1445, %v1450
        %v1455 = vrsqrt.pop %v1444
        %v1456 = vmul.f32 %v1455, %v1444
        %v1457 = vmul.f32 %v1456, %v1455
        %v1458 = vmul.f32 0.5, %v1457
        %v1459 = vsub.f32 1.5, %v1458
        %v1460 = vmul.f32 %v1455, %v1459
        %vm1461 = vweird.f32 %v1444
        %vm1462 = vweird.f32 %v1455
        %vm1463 = vmor %vm1461, %vm1462
        %v1464 = vsel %vm1463, %v1455, %v1460
        %v1465 = vmul.f32 %v1407, %v1454
        %v1466 = vmul.f32 %v1408, %v1464
        %v1467 = vmul.f32 %v1409, %v1454
        %v1468 = vmul.f32 %v1410, %v1464
        %v1469 = vmul.f32 %v1411, %v1454
        %v1470 = vmul.f32 %v1412, %v1464
        %v1471 = vmul.f32 %v1413, %v1454
        %v1472 = vmul.f32 %v1414, %v1464
        %1474 = vset.pattern.permute.xlu0 0
        %1475 = vperm.xlu0 %1474, %v1012
        %v1476 = vpop.permute.xlu0 %1475
        %1479 = vset.pattern.permute.xlu0 0
        %1480 = vperm.xlu0 %1479, %v1013
        %v1481 = vpop.permute.xlu0 %1480
        %1484 = vset.pattern.permute.xlu0 0
        %1485 = vperm.xlu0 %1484, %v1014
        %v1486 = vpop.permute.xlu0 %1485
        %1489 = vset.pattern.permute.xlu0 0
        %1490 = vperm.xlu0 %1489, %v1015
        %v1491 = vpop.permute.xlu0 %1490
        %v1493 = vmul.f32 %v1465, %v1476
        %v1494 = vmul.f32 %v1466, %v1476
        %v1495 = vmul.f32 %v1467, %v1481
        %v1496 = vmul.f32 %v1468, %v1481
        %v1497 = vmul.f32 %v1469, %v1486
        %v1498 = vmul.f32 %v1470, %v1486
        %v1499 = vmul.f32 %v1471, %v1491
        %v1500 = vmul.f32 %v1472, %v1491
        %1502 = vset.pattern.permute.xlu0 0
        %1503 = vperm.xlu0 %1502, %v1016
        %v1504 = vpop.permute.xlu0 %1503
        %1507 = vset.pattern.permute.xlu0 0
        %1508 = vperm.xlu0 %1507, %v1017
        %v1509 = vpop.permute.xlu0 %1508
        %1512 = vset.pattern.permute.xlu0 0
        %1513 = vperm.xlu0 %1512, %v1018
        %v1514 = vpop.permute.xlu0 %1513
        %1517 = vset.pattern.permute.xlu0 0
        %1518 = vperm.xlu0 %1517, %v1019
        %v1519 = vpop.permute.xlu0 %1518
        %v1521 = vadd.f32 %v1493, %v1504
        %v1522 = vadd.f32 %v1494, %v1504
        %v1523 = vadd.f32 %v1495, %v1509
        %v1524 = vadd.f32 %v1496, %v1509
        %v1525 = vadd.f32 %v1497, %v1514
        %v1526 = vadd.f32 %v1498, %v1514
        %v1527 = vadd.f32 %v1499, %v1519
        %v1528 = vadd.f32 %v1500, %v1519
        %v1529 = vld [vmem:[%s2 + $0x128] sm:$0xff]
        %v1530 = vld [vmem:[%s2 + $0x130] sm:$0xff]
        %v1531 = vld [vmem:[%s2 + $0x138] sm:$0xff]
        %v1532 = vld [vmem:[%s2 + $0x140] sm:$0xff]
        %v1533 = vld [vmem:[%s2 + $0x148] sm:$0xff]
        %v1534 = vld [vmem:[%s2 + $0x150] sm:$0xff]
        %v1535 = vld [vmem:[%s2 + $0x158] sm:$0xff]
        %v1536 = vld [vmem:[%s2 + $0x160] sm:$0xff]
        %v1537 = vld [vmem:[%s2 + $0x168] sm:$0xff]
        %v1538 = vld [vmem:[%s2 + $0x170] sm:$0xff]
        %v1539 = vld [vmem:[%s2 + $0x178] sm:$0xff]
        %v1540 = vld [vmem:[%s2 + $0x180] sm:$0xff]
        %v1541 = vld [vmem:[%s2 + $0x188] sm:$0xff]
        %v1542 = vld [vmem:[%s2 + $0x190] sm:$0xff]
        %v1543 = vld [vmem:[%s2 + $0x198] sm:$0xff]
        %v1544 = vld [vmem:[%s2 + $0x1a0] sm:$0xff]
        %v1545 = vld [vmem:[%s2 + $0x1a8] sm:$0xff]
        %v1546 = vld [vmem:[%s2 + $0x1b0] sm:$0xff]
        %v1547 = vld [vmem:[%s2 + $0x1b8] sm:$0xff]
        %v1548 = vld [vmem:[%s2 + $0x1c0] sm:$0xff]
        %v1549 = vld [vmem:[%s2 + $0x1c8] sm:$0xff]
        %v1550 = vld [vmem:[%s2 + $0x1d0] sm:$0xff]
        %v1551 = vld [vmem:[%s3 + $0x188] sm:$0xff]
        %v1552 = vld [vmem:[%s3 + $0x190] sm:$0xff]
        %v1553 = vld [vmem:[%s3 + $0x198] sm:$0xff]
        %v1554 = vld [vmem:[%s3 + $0x1a0] sm:$0xff]
        %v1555 = vld [vmem:[%s3 + $0x1a8] sm:$0xff]
        %v1556 = vld [vmem:[%s3 + $0x1b0] sm:$0xff]
        %v1557 = vld [vmem:[%s3 + $0x1b8] sm:$0xff]
        %v1558 = vld [vmem:[%s3 + $0x1c0] sm:$0xff]
        %v1559 = vld [vmem:[%s3 + $0x1c8] sm:$0xff]
        %v1560 = vld [vmem:[%s3 + $0x1d0] sm:$0xff]
        %v1561 = vld [vmem:[%s3 + $0x1d8] sm:$0xff]
        %v1562 = vld [vmem:[%s3 + $0x1e0] sm:$0xff]
        %v1563 = vld [vmem:[%s3 + $0x1e8] sm:$0xff]
        %v1564 = vld [vmem:[%s3 + $0x1f0] sm:$0xff]
        %v1565 = vld [vmem:[%s3 + $0x1f8] sm:$0xff]
        %v1566 = vld [vmem:[%s3 + $0x200] sm:$0xff]
        %v1567 = vld [vmem:[%s3 + $0x208] sm:$0xff]
        %v1568 = vld [vmem:[%s3 + $0x210] sm:$0xff]
        %v1569 = vld [vmem:[%s3 + $0x218] sm:$0xff]
        %v1570 = vld [vmem:[%s3 + $0x220] sm:$0xff]
        %v1571 = vld [vmem:[%s3 + $0x228] sm:$0xff]
        %v1572 = vld [vmem:[%s3 + $0x230] sm:$0xff]
        %v1573 = vld [vmem:[%s3 + $0x238] sm:$0xff]
        %v1574 = vld [vmem:[%s3 + $0x240] sm:$0xff]
        %v1575 = vld [vmem:[%s3 + $0x248] sm:$0xff]
        %v1576 = vld [vmem:[%s3 + $0x250] sm:$0xff]
        %1578 = vset.pattern.permute.xlu0 0
        %1579 = vperm.xlu0 %1578, %v1551
        %v1580 = vpop.permute.xlu0 %1579
        %1583 = vset.pattern.permute.xlu0 0
        %1584 = vperm.xlu0 %1583, %v1552
        %v1585 = vpop.permute.xlu0 %1584
        %1588 = vset.pattern.permute.xlu0 0
        %1589 = vperm.xlu0 %1588, %v1553
        %v1590 = vpop.permute.xlu0 %1589
        %1593 = vset.pattern.permute.xlu0 0
        %1594 = vperm.xlu0 %1593, %v1554
        %v1595 = vpop.permute.xlu0 %1594
        %1598 = vset.pattern.permute.xlu0 0
        %1599 = vperm.xlu0 %1598, %v1555
        %v1600 = vpop.permute.xlu0 %1599
        %1603 = vset.pattern.permute.xlu0 0
        %1604 = vperm.xlu0 %1603, %v1556
        %v1605 = vpop.permute.xlu0 %1604
        %1608 = vset.pattern.permute.xlu0 0
        %1609 = vperm.xlu0 %1608, %v1557
        %v1610 = vpop.permute.xlu0 %1609
        %1613 = vset.pattern.permute.xlu0 0
        %1614 = vperm.xlu0 %1613, %v1558
        %v1615 = vpop.permute.xlu0 %1614
        %1618 = vset.pattern.permute.xlu0 0
        %1619 = vperm.xlu0 %1618, %v1559
        %v1620 = vpop.permute.xlu0 %1619
        %1623 = vset.pattern.permute.xlu0 0
        %1624 = vperm.xlu0 %1623, %v1560
        %v1625 = vpop.permute.xlu0 %1624
        %1628 = vset.pattern.permute.xlu0 0
        %1629 = vperm.xlu0 %1628, %v1561
        %v1630 = vpop.permute.xlu0 %1629
        %1633 = vset.pattern.permute.xlu0 0
        %1634 = vperm.xlu0 %1633, %v1562
        %v1635 = vpop.permute.xlu0 %1634
        %1638 = vset.pattern.permute.xlu0 0
        %1639 = vperm.xlu0 %1638, %v1563
        %v1640 = vpop.permute.xlu0 %1639
        %1643 = vset.pattern.permute.xlu0 0
        %1644 = vperm.xlu0 %1643, %v1564
        %v1645 = vpop.permute.xlu0 %1644
        %1648 = vset.pattern.permute.xlu0 0
        %1649 = vperm.xlu0 %1648, %v1565
        %v1650 = vpop.permute.xlu0 %1649
        %1653 = vset.pattern.permute.xlu0 0
        %1654 = vperm.xlu0 %1653, %v1566
        %v1655 = vpop.permute.xlu0 %1654
        %1657 = vmatpush.msra.mxu0 %v1527
        %1658 = vmatpush.msra.mxu0 %v1525
        %1659 = vmatpush.msra.mxu0 %v1523
        %1660 = vmatpush.msra.mxu0 %v1521
        %1661 = vmatpush.msra.mxu0 %v582
        %1662 = vmatpush.msra.mxu0 %v579
        %1663 = vmatpush.msra.mxu0 %v576
        %1664 = vmatpush.msra.mxu0 %v573
        %1665 = vmatpush.msra.mxu0 %v376
        %1666 = vmatpush.msra.mxu0 %v373
        %1667 = vmatpush.msra.mxu0 %v370
        %1668 = vmatpush.msra.mxu0 %v367
        %1669 = vmatpush.msra.mxu0 %v1527
        %1670 = vmatpush.msra.mxu0 %v1525
        %1671 = vmatpush.msra.mxu0 %v1523
        %1672 = vmatpush.msra.mxu0 %v1521
        %1673 = vmatmul.f32.gmra.mxu0 %v1529
        %v1674 = vpop.f32.mrf.mxu0
        %v1675 = vadd.f32 %v1580, %v1674
        %1676 = vmatmul.f32.gmra.mxu0 %v1530
        %v1677 = vpop.f32.mrf.mxu0
        %v1678 = vadd.f32 %v1585, %v1677
        %1679 = vmatmul.f32.gmra.mxu0 %v1531
        %v1680 = vpop.f32.mrf.mxu0
        %v1681 = vadd.f32 %v1590, %v1680
        %1682 = vmatmul.f32.gmra.mxu0 %v1532
        %v1683 = vpop.f32.mrf.mxu0
        %v1684 = vadd.f32 %v1595, %v1683
        %1685 = vmatmul.f32.gmra.mxu0 %v1533
        %v1686 = vpop.f32.mrf.mxu0
        %v1687 = vadd.f32 %v1600, %v1686
        %1688 = vmatmul.f32.gmra.mxu0 %v1534
        %v1689 = vpop.f32.mrf.mxu0
        %v1690 = vadd.f32 %v1605, %v1689
        %1691 = vmatmul.f32.gmra.mxu0 %v1535
        %v1692 = vpop.f32.mrf.mxu0
        %v1693 = vadd.f32 %v1610, %v1692
        %1694 = vmatmul.f32.gmra.mxu0 %v1536
        %v1695 = vpop.f32.mrf.mxu0
        %v1696 = vadd.f32 %v1615, %v1695
        %1697 = vmatmul.f32.gmra.mxu0 %v1537
        %v1698 = vpop.f32.mrf.mxu0
        %v1699 = vadd.f32 %v1620, %v1698
        %1700 = vmatmul.f32.gmra.mxu0 %v1538
        %v1701 = vpop.f32.mrf.mxu0
        %v1702 = vadd.f32 %v1625, %v1701
        %1703 = vmatmul.f32.gmra.mxu0 %v1539
        %v1704 = vpop.f32.mrf.mxu0
        %v1705 = vadd.f32 %v1630, %v1704
        %1706 = vmatmul.f32.gmra.mxu0 %v1540
        %v1707 = vpop.f32.mrf.mxu0
        %v1708 = vadd.f32 %v1635, %v1707
        %1709 = vmatmul.f32.gmra.mxu0 %v1541
        %v1710 = vpop.f32.mrf.mxu0
        %v1711 = vadd.f32 %v1640, %v1710
        %1712 = vmatmul.f32.gmra.mxu0 %v1542
        %v1713 = vpop.f32.mrf.mxu0
        %v1714 = vadd.f32 %v1645, %v1713
        %1715 = vmatmul.f32.gmra.mxu0 %v1543
        %v1716 = vpop.f32.mrf.mxu0
        %v1717 = vadd.f32 %v1650, %v1716
        %1718 = vmatmul.f32.gmra.mxu0 %v1544
        %v1719 = vpop.f32.mrf.mxu0
        %v1720 = vadd.f32 %v1655, %v1719
        %1721 = vdwg.mxu0
        %1722 = vmatpush.msra.mxu0 %v1528
        %1723 = vmatpush.msra.mxu0 %v1526
        %1724 = vmatpush.msra.mxu0 %v1524
        %1725 = vmatpush.msra.mxu0 %v1522
        %1726 = vmatpush.msra.mxu0 %v611
        %1727 = vmatpush.msra.mxu0 %v608
        %1728 = vmatpush.msra.mxu0 %v605
        %1729 = vmatpush.msra.mxu0 %v602
        %1730 = vmatpush.msra.mxu0 %v405
        %1731 = vmatpush.msra.mxu0 %v402
        %1732 = vmatpush.msra.mxu0 %v399
        %1733 = vmatpush.msra.mxu0 %v396
        %1734 = vmatpush.msra.mxu0 %v1528
        %1735 = vmatpush.msra.mxu0 %v1526
        %1736 = vmatpush.msra.mxu0 %v1524
        %1737 = vmatpush.msra.mxu0 %v1522
        %1738 = vmatmul.f32.gmra.mxu0 %v1529
        %v1739 = vpop.f32.mrf.mxu0
        %v1740 = vadd.f32 %v1580, %v1739
        %1741 = vmatmul.f32.gmra.mxu0 %v1530
        %v1742 = vpop.f32.mrf.mxu0
        %v1743 = vadd.f32 %v1585, %v1742
        %1744 = vmatmul.f32.gmra.mxu0 %v1531
        %v1745 = vpop.f32.mrf.mxu0
        %v1746 = vadd.f32 %v1590, %v1745
        %1747 = vmatmul.f32.gmra.mxu0 %v1532
        %v1748 = vpop.f32.mrf.mxu0
        %v1749 = vadd.f32 %v1595, %v1748
        %1750 = vmatmul.f32.gmra.mxu0 %v1533
        %v1751 = vpop.f32.mrf.mxu0
        %v1752 = vadd.f32 %v1600, %v1751
        %1753 = vmatmul.f32.gmra.mxu0 %v1534
        %v1754 = vpop.f32.mrf.mxu0
        %v1755 = vadd.f32 %v1605, %v1754
        %1756 = vmatmul.f32.gmra.mxu0 %v1535
        %v1757 = vpop.f32.mrf.mxu0
        %v1758 = vadd.f32 %v1610, %v1757
        %1759 = vmatmul.f32.gmra.mxu0 %v1536
        %v1760 = vpop.f32.mrf.mxu0
        %v1761 = vadd.f32 %v1615, %v1760
        %1762 = vmatmul.f32.gmra.mxu0 %v1537
        %v1763 = vpop.f32.mrf.mxu0
        %v1764 = vadd.f32 %v1620, %v1763
        %1765 = vmatmul.f32.gmra.mxu0 %v1538
        %v1766 = vpop.f32.mrf.mxu0
        %v1767 = vadd.f32 %v1625, %v1766
        %1768 = vmatmul.f32.gmra.mxu0 %v1539
        %v1769 = vpop.f32.mrf.mxu0
        %v1770 = vadd.f32 %v1630, %v1769
        %1771 = vmatmul.f32.gmra.mxu0 %v1540
        %v1772 = vpop.f32.mrf.mxu0
        %v1773 = vadd.f32 %v1635, %v1772
        %1774 = vmatmul.f32.gmra.mxu0 %v1541
        %v1775 = vpop.f32.mrf.mxu0
        %v1776 = vadd.f32 %v1640, %v1775
        %1777 = vmatmul.f32.gmra.mxu0 %v1542
        %v1778 = vpop.f32.mrf.mxu0
        %v1779 = vadd.f32 %v1645, %v1778
        %1780 = vmatmul.f32.gmra.mxu0 %v1543
        %v1781 = vpop.f32.mrf.mxu0
        %v1782 = vadd.f32 %v1650, %v1781
        %1783 = vmatmul.f32.gmra.mxu0 %v1544
        %v1784 = vpop.f32.mrf.mxu0
        %v1785 = vadd.f32 %v1655, %v1784
        %1786 = vdwg.mxu0
        %v1787 = vmax.f32 %v1675, 0.0
        %v1788 = vmax.f32 %v1740, 0.0
        %v1789 = vmax.f32 %v1678, 0.0
        %v1790 = vmax.f32 %v1743, 0.0
        %v1791 = vmax.f32 %v1681, 0.0
        %v1792 = vmax.f32 %v1746, 0.0
        %v1793 = vmax.f32 %v1684, 0.0
        %v1794 = vmax.f32 %v1749, 0.0
        %v1795 = vmax.f32 %v1687, 0.0
        %v1796 = vmax.f32 %v1752, 0.0
        %v1797 = vmax.f32 %v1690, 0.0
        %v1798 = vmax.f32 %v1755, 0.0
        %v1799 = vmax.f32 %v1693, 0.0
        %v1800 = vmax.f32 %v1758, 0.0
        %v1801 = vmax.f32 %v1696, 0.0
        %v1802 = vmax.f32 %v1761, 0.0
        %v1803 = vmax.f32 %v1699, 0.0
        %v1804 = vmax.f32 %v1764, 0.0
        %v1805 = vmax.f32 %v1702, 0.0
        %v1806 = vmax.f32 %v1767, 0.0
        %v1807 = vmax.f32 %v1705, 0.0
        %v1808 = vmax.f32 %v1770, 0.0
        %v1809 = vmax.f32 %v1708, 0.0
        %v1810 = vmax.f32 %v1773, 0.0
        %v1811 = vmax.f32 %v1711, 0.0
        %v1812 = vmax.f32 %v1776, 0.0
        %v1813 = vmax.f32 %v1714, 0.0
        %v1814 = vmax.f32 %v1779, 0.0
        %v1815 = vmax.f32 %v1717, 0.0
        %v1816 = vmax.f32 %v1782, 0.0
        %v1817 = vmax.f32 %v1720, 0.0
        %v1818 = vmax.f32 %v1785, 0.0
        %1820 = vset.pattern.permute.xlu0 0
        %1821 = vperm.xlu0 %1820, %v1567
        %v1822 = vpop.permute.xlu0 %1821
        %1825 = vset.pattern.permute.xlu0 0
        %1826 = vperm.xlu0 %1825, %v1568
        %v1827 = vpop.permute.xlu0 %1826
        %1829 = vmatpush.msra.mxu0 %v1817
        %1830 = vmatpush.msra.mxu0 %v1815
        %1831 = vmatpush.msra.mxu0 %v1813
        %1832 = vmatpush.msra.mxu0 %v1811
        %1833 = vmatpush.msra.mxu0 %v1809
        %1834 = vmatpush.msra.mxu0 %v1807
        %1835 = vmatpush.msra.mxu0 %v1805
        %1836 = vmatpush.msra.mxu0 %v1803
        %1837 = vmatpush.msra.mxu0 %v1801
        %1838 = vmatpush.msra.mxu0 %v1799
        %1839 = vmatpush.msra.mxu0 %v1797
        %1840 = vmatpush.msra.mxu0 %v1795
        %1841 = vmatpush.msra.mxu0 %v1793
        %1842 = vmatpush.msra.mxu0 %v1791
        %1843 = vmatpush.msra.mxu0 %v1789
        %1844 = vmatpush.msra.mxu0 %v1787
        %1845 = vmatmul.f32.gmra.mxu0 %v1545
        %v1846 = vpop.f32.mrf.mxu0
        %v1847 = vadd.f32 %v1822, %v1846
        %1848 = vmatmul.f32.gmra.mxu0 %v1546
        %v1849 = vpop.f32.mrf.mxu0
        %v1850 = vadd.f32 %v1827, %v1849
        %1851 = vdwg.mxu0
        %1852 = vmatpush.msra.mxu0 %v1818
        %1853 = vmatpush.msra.mxu0 %v1816
        %1854 = vmatpush.msra.mxu0 %v1814
        %1855 = vmatpush.msra.mxu0 %v1812
        %1856 = vmatpush.msra.mxu0 %v1810
        %1857 = vmatpush.msra.mxu0 %v1808
        %1858 = vmatpush.msra.mxu0 %v1806
        %1859 = vmatpush.msra.mxu0 %v1804
        %1860 = vmatpush.msra.mxu0 %v1802
        %1861 = vmatpush.msra.mxu0 %v1800
        %1862 = vmatpush.msra.mxu0 %v1798
        %1863 = vmatpush.msra.mxu0 %v1796
        %1864 = vmatpush.msra.mxu0 %v1794
        %1865 = vmatpush.msra.mxu0 %v1792
        %1866 = vmatpush.msra.mxu0 %v1790
        %1867 = vmatpush.msra.mxu0 %v1788
        %1868 = vmatmul.f32.gmra.mxu0 %v1545
        %v1869 = vpop.f32.mrf.mxu0
        %v1870 = vadd.f32 %v1822, %v1869
        %1871 = vmatmul.f32.gmra.mxu0 %v1546
        %v1872 = vpop.f32.mrf.mxu0
        %v1873 = vadd.f32 %v1827, %v1872
        %1874 = vdwg.mxu0
        %v1875 = vmax.f32 %v1847, 0.0
        %v1876 = vmax.f32 %v1870, 0.0
        %v1877 = vmax.f32 %v1850, 0.0
        %v1878 = vmax.f32 %v1873, 0.0
        %1880 = vset.pattern.permute.xlu0 0
        %1881 = vperm.xlu0 %1880, %v1569
        %v1882 = vpop.permute.xlu0 %1881
        %1885 = vset.pattern.permute.xlu0 0
        %1886 = vperm.xlu0 %1885, %v1570
        %v1887 = vpop.permute.xlu0 %1886
        %v1890 = vsel %vm760, %v1547, 0
        %v1893 = vsel %vm760, %v1548, 0
        %1895 = vmatpush.msra.mxu0 0.0
        %1896 = vmatpush.msra.mxu0 0.0
        %1897 = vmatpush.msra.mxu0 0.0
        %1898 = vmatpush.msra.mxu0 0.0
        %1899 = vmatpush.msra.mxu0 0.0
        %1900 = vmatpush.msra.mxu0 0.0
        %1901 = vmatpush.msra.mxu0 0.0
        %1902 = vmatpush.msra.mxu0 0.0
        %1903 = vmatpush.msra.mxu0 0.0
        %1904 = vmatpush.msra.mxu0 0.0
        %1905 = vmatpush.msra.mxu0 0.0
        %1906 = vmatpush.msra.mxu0 0.0
        %1907 = vmatpush.msra.mxu0 0.0
        %1908 = vmatpush.msra.mxu0 0.0
        %1909 = vmatpush.msra.mxu0 %v1877
        %1910 = vmatpush.msra.mxu0 %v1875
        %1911 = vmatmul.f32.gmra.mxu0 %v1890
        %v1912 = vpop.f32.mrf.mxu0
        %v1913 = vadd.f32 %v1882, %v1912
        %1914 = vmatmul.f32.gmra.mxu0 %v1893
        %v1915 = vpop.f32.mrf.mxu0
        %v1916 = vadd.f32 %v1887, %v1915
        %1917 = vdwg.mxu0
        %1918 = vmatpush.msra.mxu0 0.0
        %1919 = vmatpush.msra.mxu0 0.0
        %1920 = vmatpush.msra.mxu0 0.0
        %1921 = vmatpush.msra.mxu0 0.0
        %1922 = vmatpush.msra.mxu0 0.0
        %1923 = vmatpush.msra.mxu0 0.0
        %1924 = vmatpush.msra.mxu0 0.0
        %1925 = vmatpush.msra.mxu0 0.0
        %1926 = vmatpush.msra.mxu0 0.0
        %1927 = vmatpush.msra.mxu0 0.0
        %1928 = vmatpush.msra.mxu0 0.0
        %1929 = vmatpush.msra.mxu0 0.0
        %1930 = vmatpush.msra.mxu0 0.0
        %1931 = vmatpush.msra.mxu0 0.0
        %1932 = vmatpush.msra.mxu0 %v1878
        %1933 = vmatpush.msra.mxu0 %v1876
        %1934 = vmatmul.f32.gmra.mxu0 %v1890
        %v1935 = vpop.f32.mrf.mxu0
        %v1936 = vadd.f32 %v1882, %v1935
        %1937 = vmatmul.f32.gmra.mxu0 %v1893
        %v1938 = vpop.f32.mrf.mxu0
        %v1939 = vadd.f32 %v1887, %v1938
        %1940 = vdwg.mxu0
        %1941 = vmatpush.msra.mxu0 %v1527
        %1942 = vmatpush.msra.mxu0 %v1525
        %1943 = vmatpush.msra.mxu0 %v1523
        %1944 = vmatpush.msra.mxu0 %v1521
        %1945 = vmatpush.msra.mxu0 %v582
        %1946 = vmatpush.msra.mxu0 %v579
        %1947 = vmatpush.msra.mxu0 %v576
        %1948 = vmatpush.msra.mxu0 %v573
        %1949 = vmatpush.msra.mxu0 %v376
        %1950 = vmatpush.msra.mxu0 %v373
        %1951 = vmatpush.msra.mxu0 %v370
        %1952 = vmatpush.msra.mxu0 %v367
        %1953 = vmatpush.msra.mxu0 %v1527
        %1954 = vmatpush.msra.mxu0 %v1525
        %1955 = vmatpush.msra.mxu0 %v1523
        %1956 = vmatpush.msra.mxu0 %v1521
        %1957 = vmatmul.f32.gmra.mxu0 %v1549
        %v1958 = vpop.f32.mrf.mxu0
        %v1959 = vadd.f32 0.0, %v1958
        %1960 = vmatmul.f32.gmra.mxu0 %v1550
        %v1961 = vpop.f32.mrf.mxu0
        %v1962 = vadd.f32 0.0, %v1961
        %1963 = vdwg.mxu0
        %1964 = vmatpush.msra.mxu0 %v1528
        %1965 = vmatpush.msra.mxu0 %v1526
        %1966 = vmatpush.msra.mxu0 %v1524
        %1967 = vmatpush.msra.mxu0 %v1522
        %1968 = vmatpush.msra.mxu0 %v611
        %1969 = vmatpush.msra.mxu0 %v608
        %1970 = vmatpush.msra.mxu0 %v605
        %1971 = vmatpush.msra.mxu0 %v602
        %1972 = vmatpush.msra.mxu0 %v405
        %1973 = vmatpush.msra.mxu0 %v402
        %1974 = vmatpush.msra.mxu0 %v399
        %1975 = vmatpush.msra.mxu0 %v396
        %1976 = vmatpush.msra.mxu0 %v1528
        %1977 = vmatpush.msra.mxu0 %v1526
        %1978 = vmatpush.msra.mxu0 %v1524
        %1979 = vmatpush.msra.mxu0 %v1522
        %1980 = vmatmul.f32.gmra.mxu0 %v1549
        %v1981 = vpop.f32.mrf.mxu0
        %v1982 = vadd.f32 0.0, %v1981
        %1983 = vmatmul.f32.gmra.mxu0 %v1550
        %v1984 = vpop.f32.mrf.mxu0
        %v1985 = vadd.f32 0.0, %v1984
        %1986 = vdwg.mxu0
        %v1987 = vadd.f32 %v1913, %v1959
        %v1988 = vadd.f32 %v1936, %v1982
        %v1989 = vadd.f32 %v1916, %v1962
        %v1990 = vadd.f32 %v1939, %v1985
        %1992 = vset.pattern.permute.xlu0 0
        %1993 = vperm.xlu0 %1992, %v1571
        %v1994 = vpop.permute.xlu0 %1993
        %1997 = vset.pattern.permute.xlu0 0
        %1998 = vperm.xlu0 %1997, %v1572
        %v1999 = vpop.permute.xlu0 %1998
        %v2001 = vadd.f32 %v1987, %v1994
        %v2002 = vadd.f32 %v1988, %v1994
        %v2003 = vadd.f32 %v1989, %v1999
        %v2004 = vadd.f32 %v1990, %v1999
        %v2005 = vadd.f32 %v2001, %v2003
        %v2006 = vrot.slane %v2005, 4
        %v2007 = vadd.f32 %v2005, %v2006
        %v2008 = vrot.slane %v2007, 2
        %v2009 = vadd.f32 %v2007, %v2008
        %v2010 = vrot.slane %v2009, 1
        %v2011 = vadd.f32 %v2009, %v2010
        %v2012 = vadd.f32 %v2002, %v2004
        %v2013 = vrot.slane %v2012, 4
        %v2014 = vadd.f32 %v2012, %v2013
        %v2015 = vrot.slane %v2014, 2
        %v2016 = vadd.f32 %v2014, %v2015
        %v2017 = vrot.slane %v2016, 1
        %v2018 = vadd.f32 %v2016, %v2017
        %v2019 = vmul.f32 %v2011, %v903
        %v2020 = vmul.f32 %v2018, %v903
        %v2021 = vsub.f32 %v2001, %v2019
        %v2022 = vsub.f32 %v2002, %v2020
        %v2023 = vsub.f32 %v2003, %v2019
        %v2024 = vsub.f32 %v2004, %v2020
        %v2025 = vmul.f32 %v2021, %v2021
        %v2026 = vmul.f32 %v2022, %v2022
        %v2027 = vmul.f32 %v2023, %v2023
        %v2028 = vmul.f32 %v2024, %v2024
        %v2029 = vadd.f32 %v2025, %v2027
        %v2030 = vrot.slane %v2029, 4
        %v2031 = vadd.f32 %v2029, %v2030
        %v2032 = vrot.slane %v2031, 2
        %v2033 = vadd.f32 %v2031, %v2032
        %v2034 = vrot.slane %v2033, 1
        %v2035 = vadd.f32 %v2033, %v2034
        %v2036 = vadd.f32 %v2026, %v2028
        %v2037 = vrot.slane %v2036, 4
        %v2038 = vadd.f32 %v2036, %v2037
        %v2039 = vrot.slane %v2038, 2
        %v2040 = vadd.f32 %v2038, %v2039
        %v2041 = vrot.slane %v2040, 1
        %v2042 = vadd.f32 %v2040, %v2041
        %v2043 = vmul.f32 %v2035, %v903
        %v2044 = vmul.f32 %v2042, %v903
        %v2045 = vadd.f32 %v2043, 1e-05
        %v2046 = vadd.f32 %v2044, 1e-05
        %v2047 = vrsqrt.pop %v2045
        %v2048 = vmul.f32 %v2047, %v2045
        %v2049 = vmul.f32 %v2048, %v2047
        %v2050 = vmul.f32 0.5, %v2049
        %v2051 = vsub.f32 1.5, %v2050
        %v2052 = vmul.f32 %v2047, %v2051
        %vm2053 = vweird.f32 %v2045
        %vm2054 = vweird.f32 %v2047
        %vm2055 = vmor %vm2053, %vm2054
        %v2056 = vsel %vm2055, %v2047, %v2052
        %v2057 = vrsqrt.pop %v2046
        %v2058 = vmul.f32 %v2057, %v2046
        %v2059 = vmul.f32 %v2058, %v2057
        %v2060 = vmul.f32 0.5, %v2059
        %v2061 = vsub.f32 1.5, %v2060
        %v2062 = vmul.f32 %v2057, %v2061
        %vm2063 = vweird.f32 %v2046
        %vm2064 = vweird.f32 %v2057
        %vm2065 = vmor %vm2063, %vm2064
        %v2066 = vsel %vm2065, %v2057, %v2062
        %v2067 = vmul.f32 %v2021, %v2056
        %v2068 = vmul.f32 %v2022, %v2066
        %v2069 = vmul.f32 %v2023, %v2056
        %v2070 = vmul.f32 %v2024, %v2066
        %2072 = vset.pattern.permute.xlu0 0
        %2073 = vperm.xlu0 %2072, %v1573
        %v2074 = vpop.permute.xlu0 %2073
        %2077 = vset.pattern.permute.xlu0 0
        %2078 = vperm.xlu0 %2077, %v1574
        %v2079 = vpop.permute.xlu0 %2078
        %v2081 = vmul.f32 %v2067, %v2074
        %v2082 = vmul.f32 %v2068, %v2074
        %v2083 = vmul.f32 %v2069, %v2079
        %v2084 = vmul.f32 %v2070, %v2079
        %2086 = vset.pattern.permute.xlu0 0
        %2087 = vperm.xlu0 %2086, %v1575
        %v2088 = vpop.permute.xlu0 %2087
        %2091 = vset.pattern.permute.xlu0 0
        %2092 = vperm.xlu0 %2091, %v1576
        %v2093 = vpop.permute.xlu0 %2092
        %v2095 = vadd.f32 %v2081, %v2088
        %v2096 = vadd.f32 %v2082, %v2088
        %v2097 = vadd.f32 %v2083, %v2093
        %v2098 = vadd.f32 %v2084, %v2093
        %v2099 = vld [vmem:[%s2 + $0x1d8] sm:$0xff]
        %v2100 = vld [vmem:[%s2 + $0x1e0] sm:$0xff]
        %v2101 = vld [vmem:[%s2 + $0x1e8] sm:$0xff]
        %v2102 = vld [vmem:[%s2 + $0x1f0] sm:$0xff]
        %v2103 = vld [vmem:[%s2 + $0x1f8] sm:$0xff]
        %v2104 = vld [vmem:[%s2 + $0x200] sm:$0xff]
        %v2105 = vld [vmem:[%s2 + $0x208] sm:$0xff]
        %v2106 = vld [vmem:[%s2 + $0x210] sm:$0xff]
        %v2107 = vld [vmem:[%s2 + $0x218] sm:$0xff]
        %v2108 = vld [vmem:[%s2 + $0x220] sm:$0xff]
        %v2109 = vld [vmem:[%s2 + $0x228] sm:$0xff]
        %v2110 = vld [vmem:[%s2 + $0x230] sm:$0xff]
        %v2111 = vld [vmem:[%s2 + $0x238] sm:$0xff]
        %v2112 = vld [vmem:[%s2 + $0x240] sm:$0xff]
        %v2113 = vld [vmem:[%s2 + $0x248] sm:$0xff]
        %v2114 = vld [vmem:[%s3 + $0x258] sm:$0xff]
        %v2115 = vld [vmem:[%s3 + $0x260] sm:$0xff]
        %v2116 = vld [vmem:[%s3 + $0x268] sm:$0xff]
        %v2117 = vld [vmem:[%s3 + $0x270] sm:$0xff]
        %v2118 = vld [vmem:[%s3 + $0x278] sm:$0xff]
        %v2119 = vld [vmem:[%s3 + $0x280] sm:$0xff]
        %v2120 = vld [vmem:[%s3 + $0x288] sm:$0xff]
        %v2121 = vld [vmem:[%s3 + $0x290] sm:$0xff]
        %v2122 = vld [vmem:[%s3 + $0x298] sm:$0xff]
        %v2123 = vld [vmem:[%s3 + $0x2a0] sm:$0xff]
        %v2124 = vld [vmem:[%s3 + $0x2a8] sm:$0xff]
        %v2125 = vld [vmem:[%s3 + $0x2b0] sm:$0xff]
        %v2126 = vld [vmem:[%s3 + $0x2b8] sm:$0xff]
        %v2127 = vld [vmem:[%s3 + $0x2c0] sm:$0xff]
        %v2128 = vld [vmem:[%s3 + $0x2c8] sm:$0xff]
        %2130 = vset.pattern.permute.xlu0 0
        %2131 = vperm.xlu0 %2130, %v2114
        %v2132 = vpop.permute.xlu0 %2131
        %2135 = vset.pattern.permute.xlu0 0
        %2136 = vperm.xlu0 %2135, %v2115
        %v2137 = vpop.permute.xlu0 %2136
        %2140 = vset.pattern.permute.xlu0 0
        %2141 = vperm.xlu0 %2140, %v2116
        %v2142 = vpop.permute.xlu0 %2141
        %2145 = vset.pattern.permute.xlu0 0
        %2146 = vperm.xlu0 %2145, %v2117
        %v2147 = vpop.permute.xlu0 %2146
        %2150 = vset.pattern.permute.xlu0 0
        %2151 = vperm.xlu0 %2150, %v2118
        %v2152 = vpop.permute.xlu0 %2151
        %2155 = vset.pattern.permute.xlu0 0
        %2156 = vperm.xlu0 %2155, %v2119
        %v2157 = vpop.permute.xlu0 %2156
        %2160 = vset.pattern.permute.xlu0 0
        %2161 = vperm.xlu0 %2160, %v2120
        %v2162 = vpop.permute.xlu0 %2161
        %2165 = vset.pattern.permute.xlu0 0
        %2166 = vperm.xlu0 %2165, %v2121
        %v2167 = vpop.permute.xlu0 %2166
        %2170 = vset.pattern.permute.xlu0 0
        %2171 = vperm.xlu0 %2170, %v2122
        %v2172 = vpop.permute.xlu0 %2171
        %2175 = vset.pattern.permute.xlu0 0
        %2176 = vperm.xlu0 %2175, %v2123
        %v2177 = vpop.permute.xlu0 %2176
        %2180 = vset.pattern.permute.xlu0 0
        %2181 = vperm.xlu0 %2180, %v2124
        %v2182 = vpop.permute.xlu0 %2181
        %2185 = vset.pattern.permute.xlu0 0
        %2186 = vperm.xlu0 %2185, %v2125
        %v2187 = vpop.permute.xlu0 %2186
        %vm2189 = vcmask 785408
        %v2191 = vsel %vm2189, %v2099, 0
        %v2194 = vsel %vm2189, %v2100, 0
        %v2197 = vsel %vm2189, %v2101, 0
        %v2200 = vsel %vm2189, %v2102, 0
        %v2203 = vsel %vm2189, %v2103, 0
        %v2206 = vsel %vm2189, %v2104, 0
        %v2209 = vsel %vm2189, %v2105, 0
        %v2212 = vsel %vm2189, %v2106, 0
        %v2215 = vsel %vm2189, %v2107, 0
        %v2218 = vsel %vm2189, %v2108, 0
        %v2221 = vsel %vm2189, %v2109, 0
        %v2224 = vsel %vm2189, %v2110, 0
        %2226 = vmatpush.msra.mxu0 0.0
        %2227 = vmatpush.msra.mxu0 0.0
        %2228 = vmatpush.msra.mxu0 0.0
        %2229 = vmatpush.msra.mxu0 0.0
        %2230 = vmatpush.msra.mxu0 %v982
        %2231 = vmatpush.msra.mxu0 %v980
        %2232 = vmatpush.msra.mxu0 %v582
        %2233 = vmatpush.msra.mxu0 %v579
        %2234 = vmatpush.msra.mxu0 %v576
        %2235 = vmatpush.msra.mxu0 %v573
        %2236 = vmatpush.msra.mxu0 %v376
        %2237 = vmatpush.msra.mxu0 %v373
        %2238 = vmatpush.msra.mxu0 %v370
        %2239 = vmatpush.msra.mxu0 %v367
        %2240 = vmatpush.msra.mxu0 %v2097
        %2241 = vmatpush.msra.mxu0 %v2095
        %2242 = vmatmul.f32.gmra.mxu0 %v2191
        %v2243 = vpop.f32.mrf.mxu0
        %v2244 = vadd.f32 %v2132, %v2243
        %2245 = vmatmul.f32.gmra.mxu0 %v2194
        %v2246 = vpop.f32.mrf.mxu0
        %v2247 = vadd.f32 %v2137, %v2246
        %2248 = vmatmul.f32.gmra.mxu0 %v2197
        %v2249 = vpop.f32.mrf.mxu0
        %v2250 = vadd.f32 %v2142, %v2249
        %2251 = vmatmul.f32.gmra.mxu0 %v2200
        %v2252 = vpop.f32.mrf.mxu0
        %v2253 = vadd.f32 %v2147, %v2252
        %2254 = vmatmul.f32.gmra.mxu0 %v2203
        %v2255 = vpop.f32.mrf.mxu0
        %v2256 = vadd.f32 %v2152, %v2255
        %2257 = vmatmul.f32.gmra.mxu0 %v2206
        %v2258 = vpop.f32.mrf.mxu0
        %v2259 = vadd.f32 %v2157, %v2258
        %2260 = vmatmul.f32.gmra.mxu0 %v2209
        %v2261 = vpop.f32.mrf.mxu0
        %v2262 = vadd.f32 %v2162, %v2261
        %2263 = vmatmul.f32.gmra.mxu0 %v2212
        %v2264 = vpop.f32.mrf.mxu0
        %v2265 = vadd.f32 %v2167, %v2264
        %2266 = vmatmul.f32.gmra.mxu0 %v2215
        %v2267 = vpop.f32.mrf.mxu0
        %v2268 = vadd.f32 %v2172, %v2267
        %2269 = vmatmul.f32.gmra.mxu0 %v2218
        %v2270 = vpop.f32.mrf.mxu0
        %v2271 = vadd.f32 %v2177, %v2270
        %2272 = vmatmul.f32.gmra.mxu0 %v2221
        %v2273 = vpop.f32.mrf.mxu0
        %v2274 = vadd.f32 %v2182, %v2273
        %2275 = vmatmul.f32.gmra.mxu0 %v2224
        %v2276 = vpop.f32.mrf.mxu0
        %v2277 = vadd.f32 %v2187, %v2276
        %2278 = vdwg.mxu0
        %2279 = vmatpush.msra.mxu0 0.0
        %2280 = vmatpush.msra.mxu0 0.0
        %2281 = vmatpush.msra.mxu0 0.0
        %2282 = vmatpush.msra.mxu0 0.0
        %2283 = vmatpush.msra.mxu0 %v983
        %2284 = vmatpush.msra.mxu0 %v981
        %2285 = vmatpush.msra.mxu0 %v611
        %2286 = vmatpush.msra.mxu0 %v608
        %2287 = vmatpush.msra.mxu0 %v605
        %2288 = vmatpush.msra.mxu0 %v602
        %2289 = vmatpush.msra.mxu0 %v405
        %2290 = vmatpush.msra.mxu0 %v402
        %2291 = vmatpush.msra.mxu0 %v399
        %2292 = vmatpush.msra.mxu0 %v396
        %2293 = vmatpush.msra.mxu0 %v2098
        %2294 = vmatpush.msra.mxu0 %v2096
        %2295 = vmatmul.f32.gmra.mxu0 %v2191
        %v2296 = vpop.f32.mrf.mxu0
        %v2297 = vadd.f32 %v2132, %v2296
        %2298 = vmatmul.f32.gmra.mxu0 %v2194
        %v2299 = vpop.f32.mrf.mxu0
        %v2300 = vadd.f32 %v2137, %v2299
        %2301 = vmatmul.f32.gmra.mxu0 %v2197
        %v2302 = vpop.f32.mrf.mxu0
        %v2303 = vadd.f32 %v2142, %v2302
        %2304 = vmatmul.f32.gmra.mxu0 %v2200
        %v2305 = vpop.f32.mrf.mxu0
        %v2306 = vadd.f32 %v2147, %v2305
        %2307 = vmatmul.f32.gmra.mxu0 %v2203
        %v2308 = vpop.f32.mrf.mxu0
        %v2309 = vadd.f32 %v2152, %v2308
        %2310 = vmatmul.f32.gmra.mxu0 %v2206
        %v2311 = vpop.f32.mrf.mxu0
        %v2312 = vadd.f32 %v2157, %v2311
        %2313 = vmatmul.f32.gmra.mxu0 %v2209
        %v2314 = vpop.f32.mrf.mxu0
        %v2315 = vadd.f32 %v2162, %v2314
        %2316 = vmatmul.f32.gmra.mxu0 %v2212
        %v2317 = vpop.f32.mrf.mxu0
        %v2318 = vadd.f32 %v2167, %v2317
        %2319 = vmatmul.f32.gmra.mxu0 %v2215
        %v2320 = vpop.f32.mrf.mxu0
        %v2321 = vadd.f32 %v2172, %v2320
        %2322 = vmatmul.f32.gmra.mxu0 %v2218
        %v2323 = vpop.f32.mrf.mxu0
        %v2324 = vadd.f32 %v2177, %v2323
        %2325 = vmatmul.f32.gmra.mxu0 %v2221
        %v2326 = vpop.f32.mrf.mxu0
        %v2327 = vadd.f32 %v2182, %v2326
        %2328 = vmatmul.f32.gmra.mxu0 %v2224
        %v2329 = vpop.f32.mrf.mxu0
        %v2330 = vadd.f32 %v2187, %v2329
        %2331 = vdwg.mxu0
        %v2332 = vmax.f32 %v2244, 0.0
        %v2333 = vmax.f32 %v2297, 0.0
        %v2334 = vmax.f32 %v2247, 0.0
        %v2335 = vmax.f32 %v2300, 0.0
        %v2336 = vmax.f32 %v2250, 0.0
        %v2337 = vmax.f32 %v2303, 0.0
        %v2338 = vmax.f32 %v2253, 0.0
        %v2339 = vmax.f32 %v2306, 0.0
        %v2340 = vmax.f32 %v2256, 0.0
        %v2341 = vmax.f32 %v2309, 0.0
        %v2342 = vmax.f32 %v2259, 0.0
        %v2343 = vmax.f32 %v2312, 0.0
        %v2344 = vmax.f32 %v2262, 0.0
        %v2345 = vmax.f32 %v2315, 0.0
        %v2346 = vmax.f32 %v2265, 0.0
        %v2347 = vmax.f32 %v2318, 0.0
        %v2348 = vmax.f32 %v2268, 0.0
        %v2349 = vmax.f32 %v2321, 0.0
        %v2350 = vmax.f32 %v2271, 0.0
        %v2351 = vmax.f32 %v2324, 0.0
        %v2352 = vmax.f32 %v2274, 0.0
        %v2353 = vmax.f32 %v2327, 0.0
        %v2354 = vmax.f32 %v2277, 0.0
        %v2355 = vmax.f32 %v2330, 0.0
        %2357 = vset.pattern.permute.xlu0 0
        %2358 = vperm.xlu0 %2357, %v2126
        %v2359 = vpop.permute.xlu0 %2358
        %v2362 = vsel %vm2189, %v2111, 0
        %2364 = vmatpush.msra.mxu0 0.0
        %2365 = vmatpush.msra.mxu0 0.0
        %2366 = vmatpush.msra.mxu0 0.0
        %2367 = vmatpush.msra.mxu0 0.0
        %2368 = vmatpush.msra.mxu0 %v2354
        %2369 = vmatpush.msra.mxu0 %v2352
        %2370 = vmatpush.msra.mxu0 %v2350
        %2371 = vmatpush.msra.mxu0 %v2348
        %2372 = vmatpush.msra.mxu0 %v2346
        %2373 = vmatpush.msra.mxu0 %v2344
        %2374 = vmatpush.msra.mxu0 %v2342
        %2375 = vmatpush.msra.mxu0 %v2340
        %2376 = vmatpush.msra.mxu0 %v2338
        %2377 = vmatpush.msra.mxu0 %v2336
        %2378 = vmatpush.msra.mxu0 %v2334
        %2379 = vmatpush.msra.mxu0 %v2332
        %2380 = vmatmul.f32.gmra.mxu0 %v2362
        %v2381 = vpop.f32.mrf.mxu0
        %v2382 = vadd.f32 %v2359, %v2381
        %2383 = vdwg.mxu0
        %2384 = vmatpush.msra.mxu0 0.0
        %2385 = vmatpush.msra.mxu0 0.0
        %2386 = vmatpush.msra.mxu0 0.0
        %2387 = vmatpush.msra.mxu0 0.0
        %2388 = vmatpush.msra.mxu0 %v2355
        %2389 = vmatpush.msra.mxu0 %v2353
        %2390 = vmatpush.msra.mxu0 %v2351
        %2391 = vmatpush.msra.mxu0 %v2349
        %2392 = vmatpush.msra.mxu0 %v2347
        %2393 = vmatpush.msra.mxu0 %v2345
        %2394 = vmatpush.msra.mxu0 %v2343
        %2395 = vmatpush.msra.mxu0 %v2341
        %2396 = vmatpush.msra.mxu0 %v2339
        %2397 = vmatpush.msra.mxu0 %v2337
        %2398 = vmatpush.msra.mxu0 %v2335
        %2399 = vmatpush.msra.mxu0 %v2333
        %2400 = vmatmul.f32.gmra.mxu0 %v2362
        %v2401 = vpop.f32.mrf.mxu0
        %v2402 = vadd.f32 %v2359, %v2401
        %2403 = vdwg.mxu0
        %v2404 = vmax.f32 %v2382, 0.0
        %v2405 = vmax.f32 %v2402, 0.0
        %2407 = vset.pattern.permute.xlu0 0
        %2408 = vperm.xlu0 %2407, %v2127
        %v2409 = vpop.permute.xlu0 %2408
        %v2412 = vsel %vm638, %v2112, 0
        %2414 = vmatpush.msra.mxu0 0.0
        %2415 = vmatpush.msra.mxu0 0.0
        %2416 = vmatpush.msra.mxu0 0.0
        %2417 = vmatpush.msra.mxu0 0.0
        %2418 = vmatpush.msra.mxu0 0.0
        %2419 = vmatpush.msra.mxu0 0.0
        %2420 = vmatpush.msra.mxu0 0.0
        %2421 = vmatpush.msra.mxu0 0.0
        %2422 = vmatpush.msra.mxu0 0.0
        %2423 = vmatpush.msra.mxu0 0.0
        %2424 = vmatpush.msra.mxu0 0.0
        %2425 = vmatpush.msra.mxu0 0.0
        %2426 = vmatpush.msra.mxu0 0.0
        %2427 = vmatpush.msra.mxu0 0.0
        %2428 = vmatpush.msra.mxu0 0.0
        %2429 = vmatpush.msra.mxu0 %v2404
        %2430 = vmatmul.f32.gmra.mxu0 %v2412
        %v2431 = vpop.f32.mrf.mxu0
        %v2432 = vadd.f32 %v2409, %v2431
        %2433 = vdwg.mxu0
        %2434 = vmatpush.msra.mxu0 0.0
        %2435 = vmatpush.msra.mxu0 0.0
        %2436 = vmatpush.msra.mxu0 0.0
        %2437 = vmatpush.msra.mxu0 0.0
        %2438 = vmatpush.msra.mxu0 0.0
        %2439 = vmatpush.msra.mxu0 0.0
        %2440 = vmatpush.msra.mxu0 0.0
        %2441 = vmatpush.msra.mxu0 0.0
        %2442 = vmatpush.msra.mxu0 0.0
        %2443 = vmatpush.msra.mxu0 0.0
        %2444 = vmatpush.msra.mxu0 0.0
        %2445 = vmatpush.msra.mxu0 0.0
        %2446 = vmatpush.msra.mxu0 0.0
        %2447 = vmatpush.msra.mxu0 0.0
        %2448 = vmatpush.msra.mxu0 0.0
        %2449 = vmatpush.msra.mxu0 %v2405
        %2450 = vmatmul.f32.gmra.mxu0 %v2412
        %v2451 = vpop.f32.mrf.mxu0
        %v2452 = vadd.f32 %v2409, %v2451
        %2453 = vdwg.mxu0
        %v2455 = vsel %vm2189, %v2113, 0
        %2457 = vmatpush.msra.mxu0 0.0
        %2458 = vmatpush.msra.mxu0 0.0
        %2459 = vmatpush.msra.mxu0 0.0
        %2460 = vmatpush.msra.mxu0 0.0
        %2461 = vmatpush.msra.mxu0 %v982
        %2462 = vmatpush.msra.mxu0 %v980
        %2463 = vmatpush.msra.mxu0 %v582
        %2464 = vmatpush.msra.mxu0 %v579
        %2465 = vmatpush.msra.mxu0 %v576
        %2466 = vmatpush.msra.mxu0 %v573
        %2467 = vmatpush.msra.mxu0 %v376
        %2468 = vmatpush.msra.mxu0 %v373
        %2469 = vmatpush.msra.mxu0 %v370
        %2470 = vmatpush.msra.mxu0 %v367
        %2471 = vmatpush.msra.mxu0 %v2097
        %2472 = vmatpush.msra.mxu0 %v2095
        %2473 = vmatmul.f32.gmra.mxu0 %v2455
        %v2474 = vpop.f32.mrf.mxu0
        %v2475 = vadd.f32 0.0, %v2474
        %2476 = vdwg.mxu0
        %2477 = vmatpush.msra.mxu0 0.0
        %2478 = vmatpush.msra.mxu0 0.0
        %2479 = vmatpush.msra.mxu0 0.0
        %2480 = vmatpush.msra.mxu0 0.0
        %2481 = vmatpush.msra.mxu0 %v983
        %2482 = vmatpush.msra.mxu0 %v981
        %2483 = vmatpush.msra.mxu0 %v611
        %2484 = vmatpush.msra.mxu0 %v608
        %2485 = vmatpush.msra.mxu0 %v605
        %2486 = vmatpush.msra.mxu0 %v602
        %2487 = vmatpush.msra.mxu0 %v405
        %2488 = vmatpush.msra.mxu0 %v402
        %2489 = vmatpush.msra.mxu0 %v399
        %2490 = vmatpush.msra.mxu0 %v396
        %2491 = vmatpush.msra.mxu0 %v2098
        %2492 = vmatpush.msra.mxu0 %v2096
        %2493 = vmatmul.f32.gmra.mxu0 %v2455
        %v2494 = vpop.f32.mrf.mxu0
        %v2495 = vadd.f32 0.0, %v2494
        %2496 = vdwg.mxu0
        %v2497 = vadd.f32 %v2432, %v2475
        %v2498 = vadd.f32 %v2452, %v2495
        %2500 = vset.pattern.permute.xlu0 0
        %2501 = vperm.xlu0 %2500, %v2128
        %v2502 = vpop.permute.xlu0 %2501
        %v2504 = vadd.f32 %v2497, %v2502
        %v2505 = vadd.f32 %v2498, %v2502
        %2506 = vst [vmem:[%s207] sm:$0xff] %v2504
        %2507 = vst [vmem:[%s207 + $0x8] sm:$0xff] %v2505
        %s2508 = sand.u32 %s120, 1
        %s2509 = scalar_lea.sflag [#allocation3], %s2508
        %s2510 = sand.u32 %s120, 1
        %s2511 = smul.addr %s2510, 16
        %s2512 = scalar_lea.vmem [#allocation2], %s2511
        // Predicated region
        $region37: #{forward.1} parent=35 // pred_check
          %p2513 = pneg %p130
        $region38: #{forward.1} parent=35 // pred_check_branch
          %2515 = sbr.rel (%p2513) target = $region40
        $region39: #{forward.1} parent=35 // pred_region
          %s2516 = smul.u32 2, %s18
          %2518 = vsyncadd %s2509, 0
          %s2519 = smul.addr %s2516, 8
          %s2520 = scalar_lea.hbm %s4, %s2519
          %s2522 = sshll.u32 %s2512, 4
          %s2523 = int_to_ptr.vmem [resolvable:$true] %s2522
          %s2524 = sshll.u32 %s2520, 4
          %s2525 = int_to_ptr.hbm [resolvable:$true] %s2524
          %2527 = dma.vmem_to_hbm [thread:$0]  %s2523, 256, %s2525, %s2509
        $region40: #{forward.1} parent=35 // pred_fallthru
          _
      $region36: #{forward.1} parent=5 // pred_fallthru
        _
      %p2528 = scmp.le.s32.totalorder 2, %s13
      // Predicated region
      $region41: #{forward.1} parent=5 // pred_check
        %p2529 = pneg %p2528
      $region42: #{forward.1} parent=5 // pred_check_branch
        %2531 = sbr.rel (%p2529) target = $region44
      $region43: #{forward.1} parent=5 // pred_region
        %s2532 = ssub.s32 %s13, 2
        // Predicated region
        $region45: #{forward.1} parent=43 // pred_check
          %p2533 = pneg %p136
        $region46: #{forward.1} parent=43 // pred_check_branch
          %2535 = sbr.rel (%p2533) target = $region48
        $region47: #{forward.1} parent=43 // pred_region
          %s2536 = sand.u32 %s121, 1
          %s2537 = scalar_lea.sflag [#allocation3], %s2536
          %s2538 = sand.u32 %s121, 1
          %s2539 = smul.addr %s2538, 16
          %s2540 = scalar_lea.vmem [#allocation2], %s2539
          %2542 = dma.done %s2537, 256
        $region48: #{forward.1} parent=43 // pred_fallthru
          _
      $region44: #{forward.1} parent=5 // pred_fallthru
        _
    $region6: #{forward.1} parent=1 // loop_footer
      %s17 = sadd.s32 1, %s13
    $region7: #{forward.1} parent=1 // loop_footer_branch
      %12 = sbr.rel target = $region3
    $region8: #{forward.1} parent=1 // loop_exit
      _
    %2543 = vsyncpa [#allocation3], 1
    %s2544 = scalar_lea.sflag [#allocation3], 1
    %2545 = vsyncpa %s2544, 1

</llo_original>
